<compile_context>
chip_gen: v5e
topology: v5e:2x2
jax: 0.10.0
libtpu: 0.0.40
codegen_flags: <defaults>
</compile_context>

<pallas_src>
import functools

import jax
import jax.numpy as jnp
from jax import lax
from jax.experimental import pallas as pl
from jax.experimental.pallas import tpu as pltpu


# ------------------------------ small helpers ------------------------------ #

def _round_up(x, m):
    return ((x + m - 1) // m) * m


def _pad_blocks(a, axis, real, pad, nblocks):
    """Split `a` along `axis` into `nblocks` chunks of size `real` and zero-pad
    each chunk to size `pad` (keeps per-gate / per-direction blocks aligned to
    the padded lane layout)."""
    if real == pad:
        return a
    parts = jnp.split(a, nblocks, axis=axis)
    widths = [(0, 0)] * a.ndim
    out = []
    for p in parts:
        w = list(widths)
        w[axis] = (0, pad - real)
        out.append(jnp.pad(p, w))
    return jnp.concatenate(out, axis=axis)


# ------------------------------ Pallas kernels ------------------------------ #

def _bigru_layer_kernel(maxlen_ref,     # SMEM [1] int32 (scalar prefetch)
                        x_ref,          # [T*Bp, Cp]  layer input (time-major, flattened)
                        len_ref,        # [Bp, 1]     int32 per-row sequence lengths
                        wih_ref,        # [Cp, 3*Hp]  input->hidden weights (this direction)
                        whh_ref,        # [Hp, 3*Hp]  hidden->hidden weights
                        bg_ref,         # [1, 3*Hp]   b_ih + [b_hr, b_hz, 0]
                        bhn_ref,        # [1, Hp]     b_hn
                        out_ref,        # [T, Bp, Hp] this direction's half of the output
                        gi_ref,         # VMEM scratch [T*Bp, 3*Hp]
                        h_ref):         # VMEM scratch [Bp, Hp]
    d = pl.program_id(0)                # 0 = forward, 1 = backward
    T, Bp, Hp = out_ref.shape
    max_len = maxlen_ref[0]

    # Hoisted input->hidden projection: one big MXU matmul for every timestep,
    # with all step-invariant biases folded in.
    gi_ref[...] = (jnp.dot(x_ref[...], wih_ref[...],
                           preferred_element_type=jnp.float32) + bg_ref[...])

    h_ref[...] = jnp.zeros(h_ref.shape, h_ref.dtype)

    # Timesteps >= max_len are never visited by the loop below; keep their
    # output rows zero (pack_padded semantics).  Skipped when max_len == T.
    @pl.when(max_len < T)
    def _():
        out_ref[...] = jnp.zeros(out_ref.shape, out_ref.dtype)

    lens = len_ref[...]                                   # [Bp, 1] int32
    bhn = jnp.broadcast_to(bhn_ref[...], (Bp, Hp))        # hoisted bias broadcast

    def step(i, carry):
        # Forward walks t = 0 .. max_len-1, backward walks t = max_len-1 .. 0.
        # Since the hidden state is frozen (mask) until t < length[b], this
        # reproduces packed bidirectional-GRU semantics with no reversal
        # gathers needed.
        tt = jnp.where(d == 0, i, max_len - 1 - i)
        row = pl.multiple_of(tt * Bp, Bp)
        gi = gi_ref[pl.ds(row, Bp), :]                    # [Bp, 3Hp]
        h = h_ref[...]                                    # [Bp, Hp]
        gh = jnp.dot(h, whh_ref[...], preferred_element_type=jnp.float32)
        r = jax.nn.sigmoid(gi[:, 0 * Hp:1 * Hp] + gh[:, 0 * Hp:1 * Hp])
        z = jax.nn.sigmoid(gi[:, 1 * Hp:2 * Hp] + gh[:, 1 * Hp:2 * Hp])
        n = jnp.tanh(gi[:, 2 * Hp:3 * Hp] + r * (gh[:, 2 * Hp:3 * Hp] + bhn))
        h_new = (1.0 - z) * n + z * h
        m = (tt < lens).astype(jnp.float32)               # [Bp, 1] validity mask
        h_ref[...] = m * h_new + (1.0 - m) * h            # freeze past seq end
        out_ref[tt] = (m * h_new).astype(out_ref.dtype)   # zero padded outputs
        return carry

    lax.fori_loop(0, max_len, step, 0)


def _combine_l2norm_kernel(x_ref, o_ref):
    # x_ref: [Tt, Bp, 2*Hp] (fwd | bwd halves);  o_ref: [Tt, Bp, Hp]
    Hp = o_ref.shape[-1]
    avg = (x_ref[:, :, :Hp] + x_ref[:, :, Hp:]) * 0.5
    ss = jnp.sum(avg * avg, axis=-1, keepdims=True)
    # rsqrt on the squared sum (EUP slot); eps keeps all-zero padded rows at 0.
    o_ref[...] = (avg * lax.rsqrt(ss + 1e-16)).astype(o_ref.dtype)


# ------------------------------ kernel wrappers ----------------------------- #

def _bigru_layer(x2d, len_col, max_len, wih2, whh2, bg2, bhn2, T, Bp, Hp):
    TB, Cp = x2d.shape
    grid_spec = pltpu.PrefetchScalarGridSpec(
        num_scalar_prefetch=1,
        grid=(2,),                                        # direction axis
        in_specs=[
            pl.BlockSpec((TB, Cp), lambda d, ml: (0, 0)),
            pl.BlockSpec((Bp, 1), lambda d, ml: (0, 0)),
            pl.BlockSpec((None, Cp, 3 * Hp), lambda d, ml: (d, 0, 0)),
            pl.BlockSpec((None, Hp, 3 * Hp), lambda d, ml: (d, 0, 0)),
            pl.BlockSpec((None, 1, 3 * Hp), lambda d, ml: (d, 0, 0)),
            pl.BlockSpec((None, 1, Hp), lambda d, ml: (d, 0, 0)),
        ],
        # the two directions fill disjoint Hp-wide halves of the output
        out_specs=pl.BlockSpec((T, Bp, Hp), lambda d, ml: (0, 0, d)),
        scratch_shapes=[pltpu.VMEM((TB, 3 * Hp), jnp.float32),
                        pltpu.VMEM((Bp, Hp), jnp.float32)],
    )
    return pl.pallas_call(
        _bigru_layer_kernel,
        out_shape=jax.ShapeDtypeStruct((T, Bp, 2 * Hp), jnp.float32),
        grid_spec=grid_spec,
        compiler_params=pltpu.CompilerParams(
            dimension_semantics=("parallel",),
            vmem_limit_bytes=48 * 1024 * 1024),
    )(max_len, x2d, len_col, wih2, whh2, bg2, bhn2)


def _combine_l2norm(x_tb2h):
    T, Bp, two_hp = x_tb2h.shape
    Hp = two_hp // 2
    t_blk = T if T <= 8 else 8
    return pl.pallas_call(
        _combine_l2norm_kernel,
        out_shape=jax.ShapeDtypeStruct((T, Bp, Hp), jnp.float32),
        grid=(pl.cdiv(T, t_blk),),
        in_specs=[pl.BlockSpec((t_blk, Bp, 2 * Hp), lambda i: (i, 0, 0))],
        out_specs=pl.BlockSpec((t_blk, Bp, Hp), lambda i: (i, 0, 0)),
        compiler_params=pltpu.CompilerParams(
            dimension_semantics=("parallel",)),
    )(x_tb2h)


# ------------------------- parameters & forward ---------------------------- #

def init_encoder_text_params(key, vocab_size, word_dim, embed_size, num_layers):
    H = embed_size
    Hp = _round_up(H, 128)
    Dp = _round_up(word_dim, 128)

    params = {}
    key, k_embed = jax.random.split(key)
    # nn.Embedding weight, uniform(-0.1, 0.1) as in init_weights()
    params["embed"] = jax.random.uniform(
        k_embed, (vocab_size, word_dim), jnp.float32, -0.1, 0.1)

    stdv = 1.0 / float(H) ** 0.5
    layers = []
    for layer in range(num_layers):
        in_dim = word_dim if layer == 0 else 2 * H
        wih_d, whh_d, bg_d, bhn_d = [], [], [], []
        for _ in range(2):                      # forward, backward
            key, k1, k2, k3, k4 = jax.random.split(key, 5)
            w_ih = jax.random.uniform(k1, (3 * H, in_dim), jnp.float32, -stdv, stdv)
            w_hh = jax.random.uniform(k2, (3 * H, H), jnp.float32, -stdv, stdv)
            b_ih = jax.random.uniform(k3, (3 * H,), jnp.float32, -stdv, stdv)
            b_hh = jax.random.uniform(k4, (3 * H,), jnp.float32, -stdv, stdv)

            # pre-transpose to [in, 3H] / [H, 3H]; pad each gate block to Hp lanes
            wih_t = _pad_blocks(jnp.transpose(w_ih), 1, H, Hp, 3)
            whh_t = _pad_blocks(jnp.transpose(w_hh), 1, H, Hp, 3)
            # pad input rows (layer 0: word_dim -> Dp; others: fwd|bwd halves H -> Hp)
            if layer == 0:
                wih_t = _pad_blocks(wih_t, 0, word_dim, Dp, 1)
            else:
                wih_t = _pad_blocks(wih_t, 0, H, Hp, 2)
            whh_t = _pad_blocks(whh_t, 0, H, Hp, 1)

            # b_ih (+ b_hr, b_hz) are folded into the hoisted x-projection;
            # b_hn stays separate (it sits inside the r * (.) term).
            bg = b_ih + jnp.concatenate([b_hh[:2 * H], jnp.zeros((H,), jnp.float32)])
            bg = _pad_blocks(bg, 0, H, Hp, 3)[None, :]
            bhn = _pad_blocks(b_hh[2 * H:], 0, H, Hp, 1)[None, :]

            wih_d.append(wih_t); whh_d.append(whh_t)
            bg_d.append(bg); bhn_d.append(bhn)

        layers.append({"wih": jnp.stack(wih_d),    # [2, Cp, 3*Hp]
                       "whh": jnp.stack(whh_d),    # [2, Hp, 3*Hp]
                       "bg": jnp.stack(bg_d),      # [2, 1, 3*Hp]
                       "bhn": jnp.stack(bhn_d)})   # [2, 1, Hp]
    params["gru"] = layers
    return params


def encoder_text_forward(params, tokens, lengths, *, embed_size, no_txtnorm=False):
    # tokens : [B, T] int32 token ids
    # lengths: [B] int32 with max(lengths) == T (as produced by
    #          pack_padded_sequence / pad_packed_sequence in the reference).
    B, T = tokens.shape
    H = embed_size
    Hp = params["gru"][0]["whh"].shape[1]
    Dp = params["gru"][0]["wih"].shape[1]
    D = params["embed"].shape[1]
    Bp = _round_up(B, 8)

    lengths = lengths.astype(jnp.int32)

    # Embedding lookup directly in time-major layout, padded to (Bp, Dp).
    # TODO(synk): the embedding gather itself stays in XLA (no cheap Pallas win).
    emb_tbd = jnp.take(params["embed"], jnp.transpose(tokens), axis=0)  # [T,B,D]
    x = jnp.pad(emb_tbd, ((0, 0), (0, Bp - B), (0, Dp - D)))            # [T,Bp,Dp]
    x2d = x.reshape(T * Bp, Dp)

    len_col = jnp.pad(lengths, (0, Bp - B)).reshape(Bp, 1)
    max_len = jnp.minimum(jnp.max(lengths), T).reshape(1)               # [1] int32

    out = None
    for lp in params["gru"]:
        out = _bigru_layer(x2d, len_col, max_len, lp["wih"], lp["whh"],
                           lp["bg"], lp["bhn"], T, Bp, Hp)              # [T,Bp,2Hp]
        x2d = out.reshape(T * Bp, 2 * Hp)     # next layer input, stays time-major

    if no_txtnorm:
        cap_tbh = (out[:, :, :Hp] + out[:, :, Hp:]) * 0.5
    else:
        cap_tbh = _combine_l2norm(out)                                  # [T,Bp,Hp]

    # single final layout change + unpad (batch_first=True like PyTorch)
    cap_emb = jnp.transpose(cap_tbh, (1, 0, 2))[:B, :, :H]              # [B,T,H]
    return cap_emb, lengths


# ---------------------------------- main ----------------------------------- #

if __name__ == "__main__":
    vocab_size, word_dim, embed_size, num_layers = 50, 32, 32, 2
    B, T = 2, 8

    key = jax.random.PRNGKey(0)
    key, k_tok = jax.random.split(key)
    params = init_encoder_text_params(key, vocab_size, word_dim,
                                      embed_size, num_layers)

    tokens = jax.random.randint(k_tok, (B, T), 0, vocab_size, dtype=jnp.int32)
    lengths = jnp.array([T, T - 2], dtype=jnp.int32)   # sorted descending

    fwd_fn = jax.jit(functools.partial(
        encoder_text_forward, embed_size=embed_size, no_txtnorm=False))
    cap_emb, cap_len = fwd_fn(params, tokens, lengths)
    jax.block_until_ready(cap_emb)

    assert cap_emb.shape == (B, T, embed_size)
    assert cap_len.shape == (B,)
    # valid positions are unit-norm, padded positions are exactly zero
    assert abs(float(jnp.linalg.norm(cap_emb[0, 0])) - 1.0) < 1e-3
    assert float(jnp.abs(cap_emb[1, T - 1]).max()) < 1e-5
    print("KERNEL_OK")
</pallas_src>

<mosaic_0001>
module attributes {stable_mosaic.version = 11 : i64} {
  func.func @_bigru_layer_kernel(%arg0: i32, %arg1: memref<1xi32, #tpu.memory_space<smem>>, %arg2: memref<64x128xf32, #tpu.memory_space<vmem>>, %arg3: memref<8x1xi32, #tpu.memory_space<vmem>>, %arg4: memref<1x128x384xf32, #tpu.memory_space<vmem>>, %arg5: memref<1x128x384xf32, #tpu.memory_space<vmem>>, %arg6: memref<1x1x384xf32, #tpu.memory_space<vmem>>, %arg7: memref<1x1x128xf32, #tpu.memory_space<vmem>>, %arg8: memref<8x8x128xf32, #tpu.memory_space<vmem>>, %arg9: memref<64x384xf32, #tpu.memory_space<vmem>>, %arg10: memref<8x128xf32, #tpu.memory_space<vmem>>) attributes {dimension_semantics = [#tpu.dimension_semantics<parallel>], iteration_bounds = array<i64: 2>, scalar_prefetch = 1 : i64, scratch_operands = 2 : i64, tpu.core_type = #tpu.core_type<tc>, window_params = [{pipeline_mode = #tpu.pipeline_mode<synchronous>, transform_indices = @transform_0, window_bounds = array<i64: 64, 128>}, {pipeline_mode = #tpu.pipeline_mode<synchronous>, transform_indices = @transform_1, window_bounds = array<i64: 8, 1>}, {transform_indices = @transform_2, window_bounds = array<i64: 1, 128, 384>}, {transform_indices = @transform_3, window_bounds = array<i64: 1, 128, 384>}, {transform_indices = @transform_4, window_bounds = array<i64: 1, 1, 384>}, {transform_indices = @transform_5, window_bounds = array<i64: 1, 1, 128>}, {transform_indices = @transform_6, window_bounds = array<i64: 8, 8, 128>}]} {
    %c0 = arith.constant 0 : index
    %0 = memref.load %arg1[%c0] : memref<1xi32, #tpu.memory_space<smem>>
    %c0_0 = arith.constant 0 : index
    %c0_1 = arith.constant 0 : index
    %1 = vector.load %arg2[%c0_0, %c0_1] : memref<64x128xf32, #tpu.memory_space<vmem>>, vector<64x128xf32>
    %c0_2 = arith.constant 0 : index
    %c0_3 = arith.constant 0 : index
    %c0_4 = arith.constant 0 : index
    %2 = vector.load %arg4[%c0_2, %c0_3, %c0_4] : memref<1x128x384xf32, #tpu.memory_space<vmem>>, vector<1x128x384xf32>
    %3 = vector.shape_cast %2 : vector<1x128x384xf32> to vector<128x384xf32>
    %cst = arith.constant dense<0.000000e+00> : vector<64x384xf32>
    %4 = tpu.matmul %1, %3, %cst {dimension_numbers = #tpu.dot_dimension_numbers<[1], [0], [0], [1], [0, 0, 1, 1], [], []>} : vector<64x128xf32>, vector<128x384xf32>, vector<64x384xf32> -> vector<64x384xf32>
    %c0_5 = arith.constant 0 : index
    %c0_6 = arith.constant 0 : index
    %c0_7 = arith.constant 0 : index
    %5 = vector.load %arg6[%c0_5, %c0_6, %c0_7] : memref<1x1x384xf32, #tpu.memory_space<vmem>>, vector<1x1x384xf32>
    %6 = vector.shape_cast %5 : vector<1x1x384xf32> to vector<1x384xf32>
    %7 = vector.broadcast %6 : vector<1x384xf32> to vector<64x384xf32>
    %8 = arith.addf %4, %7 : vector<64x384xf32>
    %c0_8 = arith.constant 0 : index
    %c0_9 = arith.constant 0 : index
    %9 = vector.load %arg9[%c0_8, %c0_9] : memref<64x384xf32, #tpu.memory_space<vmem>>, vector<64x384xf32>
    tpu.vector_store %arg9[%c0_8, %c0_9], %8 {strides = array<i32>} : memref<64x384xf32, #tpu.memory_space<vmem>>, vector<64x384xf32>,
    %cst_10 = arith.constant 0.000000e+00 : f32
    %10 = vector.broadcast %cst_10 : f32 to vector<8x128xf32>
    %c0_11 = arith.constant 0 : index
    %c0_12 = arith.constant 0 : index
    %11 = vector.load %arg10[%c0_11, %c0_12] : memref<8x128xf32, #tpu.memory_space<vmem>>, vector<8x128xf32>
    tpu.vector_store %arg10[%c0_11, %c0_12], %10 {strides = array<i32>} : memref<8x128xf32, #tpu.memory_space<vmem>>, vector<8x128xf32>,
    %c8_i32 = arith.constant 8 : i32
    %12 = arith.cmpi slt, %0, %c8_i32 : i32
    %13 = arith.extui %12 : i1 to i32
    %c0_i32 = arith.constant 0 : i32
    %14 = arith.cmpi ne, %13, %c0_i32 : i32
    scf.if %14 {
      %cst_20 = arith.constant 0.000000e+00 : f32
      %22 = vector.broadcast %cst_20 : f32 to vector<8x8x128xf32>
      %c0_21 = arith.constant 0 : index
      %c0_22 = arith.constant 0 : index
      %c0_23 = arith.constant 0 : index
      %23 = vector.load %arg8[%c0_21, %c0_22, %c0_23] : memref<8x8x128xf32, #tpu.memory_space<vmem>>, vector<8x8x128xf32>
      tpu.vector_store %arg8[%c0_21, %c0_22, %c0_23], %22 {strides = array<i32>} : memref<8x8x128xf32, #tpu.memory_space<vmem>>, vector<8x8x128xf32>,
    } else {
    }
    %c0_13 = arith.constant 0 : index
    %c0_14 = arith.constant 0 : index
    %15 = vector.load %arg3[%c0_13, %c0_14] : memref<8x1xi32, #tpu.memory_space<vmem>>, vector<8x1xi32>
    %c0_15 = arith.constant 0 : index
    %c0_16 = arith.constant 0 : index
    %c0_17 = arith.constant 0 : index
    %16 = vector.load %arg7[%c0_15, %c0_16, %c0_17] : memref<1x1x128xf32, #tpu.memory_space<vmem>>, vector<1x1x128xf32>
    %17 = vector.shape_cast %16 : vector<1x1x128xf32> to vector<1x128xf32>
    %18 = vector.shape_cast %17 : vector<1x128xf32> to vector<1x128xf32>
    %19 = vector.broadcast %18 : vector<1x128xf32> to vector<8x128xf32>
    %c0_i32_18 = arith.constant 0 : i32
    %c0_i32_19 = arith.constant 0 : i32
    %20 = arith.subi %0, %c0_i32_19 : i32
    %21 = arith.addi %c0_i32_19, %20 : i32
    %c1_i32 = arith.constant 1 : i32
    scf.for %arg11 = %c0_i32_19 to %21 step %c1_i32  : i32 {
      %c0_i32_20 = arith.constant 0 : i32
      %22 = arith.cmpi eq, %arg0, %c0_i32_20 : i32
      %c1_i32_21 = arith.constant 1 : i32
      %23 = arith.subi %0, %c1_i32_21 : i32
      %24 = arith.subi %23, %arg11 : i32
      %25 = arith.select %22, %arg11, %24 : i32
      %c8_i32_22 = arith.constant 8 : i32
      %26 = arith.muli %25, %c8_i32_22 : i32
      %27 = tpu.assume_multiple %26, 8 : i32
      %28 = arith.index_cast %27 : i32 to index
      %c0_23 = arith.constant 0 : index
      %29 = vector.load %arg9[%28, %c0_23] : memref<64x384xf32, #tpu.memory_space<vmem>>, vector<8x384xf32>
      %c0_24 = arith.constant 0 : index
      %c0_25 = arith.constant 0 : index
      %30 = vector.load %arg10[%c0_24, %c0_25] : memref<8x128xf32, #tpu.memory_space<vmem>>, vector<8x128xf32>
      %c0_26 = arith.constant 0 : index
      %c0_27 = arith.constant 0 : index
      %c0_28 = arith.constant 0 : index
      %31 = vector.load %arg5[%c0_26, %c0_27, %c0_28] : memref<1x128x384xf32, #tpu.memory_space<vmem>>, vector<1x128x384xf32>
      %32 = vector.shape_cast %31 : vector<1x128x384xf32> to vector<128x384xf32>
      %cst_29 = arith.constant dense<0.000000e+00> : vector<8x384xf32>
      %33 = tpu.matmul %30, %32, %cst_29 {dimension_numbers = #tpu.dot_dimension_numbers<[1], [0], [0], [1], [0, 0, 1, 1], [], []>} : vector<8x128xf32>, vector<128x384xf32>, vector<8x384xf32> -> vector<8x384xf32>
      %34 = vector.extract_strided_slice %29 {offsets = [0, 0], sizes = [8, 128], strides = [1, 1]} : vector<8x384xf32> to vector<8x128xf32>
      %35 = vector.extract_strided_slice %33 {offsets = [0, 0], sizes = [8, 128], strides = [1, 1]} : vector<8x384xf32> to vector<8x128xf32>
      %36 = arith.addf %34, %35 : vector<8x128xf32>
      %37 = arith.negf %36 : vector<8x128xf32>
      %38 = math.exp %37 : vector<8x128xf32>
      %cst_30 = arith.constant 1.000000e+00 : f32
      %39 = vector.broadcast %cst_30 : f32 to vector<8x128xf32>
      %40 = arith.addf %39, %38 : vector<8x128xf32>
      %41 = arith.divf %39, %40 : vector<8x128xf32>
      %42 = vector.extract_strided_slice %29 {offsets = [0, 128], sizes = [8, 128], strides = [1, 1]} : vector<8x384xf32> to vector<8x128xf32>
      %43 = vector.extract_strided_slice %33 {offsets = [0, 128], sizes = [8, 128], strides = [1, 1]} : vector<8x384xf32> to vector<8x128xf32>
      %44 = arith.addf %42, %43 : vector<8x128xf32>
      %45 = arith.negf %44 : vector<8x128xf32>
      %46 = math.exp %45 : vector<8x128xf32>
      %cst_31 = arith.constant 1.000000e+00 : f32
      %47 = vector.broadcast %cst_31 : f32 to vector<8x128xf32>
      %48 = arith.addf %47, %46 : vector<8x128xf32>
      %49 = arith.divf %47, %48 : vector<8x128xf32>
      %50 = vector.extract_strided_slice %29 {offsets = [0, 256], sizes = [8, 128], strides = [1, 1]} : vector<8x384xf32> to vector<8x128xf32>
      %51 = vector.extract_strided_slice %33 {offsets = [0, 256], sizes = [8, 128], strides = [1, 1]} : vector<8x384xf32> to vector<8x128xf32>
      %52 = arith.addf %51, %19 : vector<8x128xf32>
      %53 = arith.mulf %41, %52 : vector<8x128xf32>
      %54 = arith.addf %50, %53 : vector<8x128xf32>
      %55 = math.tanh %54 : vector<8x128xf32>
      %cst_32 = arith.constant 1.000000e+00 : f32
      %56 = vector.broadcast %cst_32 : f32 to vector<8x128xf32>
      %57 = arith.subf %56, %49 : vector<8x128xf32>
      %58 = arith.mulf %57, %55 : vector<8x128xf32>
      %59 = arith.mulf %49, %30 : vector<8x128xf32>
      %60 = arith.addf %58, %59 : vector<8x128xf32>
      %61 = vector.broadcast %25 : i32 to vector<8x1xi32>
      %62 = arith.cmpi slt, %61, %15 : vector<8x1xi32>
      %63 = arith.extui %62 : vector<8x1xi1> to vector<8x1xi32>
      %64 = arith.sitofp %63 : vector<8x1xi32> to vector<8x1xf32>
      %65 = vector.broadcast %64 : vector<8x1xf32> to vector<8x128xf32>
      %66 = arith.mulf %65, %60 : vector<8x128xf32>
      %cst_33 = arith.constant 1.000000e+00 : f32
      %67 = vector.broadcast %cst_33 : f32 to vector<8x1xf32>
      %68 = arith.subf %67, %64 : vector<8x1xf32>
      %69 = vector.broadcast %68 : vector<8x1xf32> to vector<8x128xf32>
      %70 = arith.mulf %69, %30 : vector<8x128xf32>
      %71 = arith.addf %66, %70 : vector<8x128xf32>
      %c0_34 = arith.constant 0 : index
      %c0_35 = arith.constant 0 : index
      %72 = vector.load %arg10[%c0_34, %c0_35] : memref<8x128xf32, #tpu.memory_space<vmem>>, vector<8x128xf32>
      tpu.vector_store %arg10[%c0_34, %c0_35], %71 {strides = array<i32>} : memref<8x128xf32, #tpu.memory_space<vmem>>, vector<8x128xf32>,
      %73 = vector.broadcast %64 : vector<8x1xf32> to vector<8x128xf32>
      %74 = arith.mulf %73, %60 : vector<8x128xf32>
      %75 = arith.index_cast %25 : i32 to index
      %c0_36 = arith.constant 0 : index
      %c0_37 = arith.constant 0 : index
      %76 = vector.load %arg8[%75, %c0_36, %c0_37] : memref<8x8x128xf32, #tpu.memory_space<vmem>>, vector<1x8x128xf32>
      %77 = vector.shape_cast %76 : vector<1x8x128xf32> to vector<8x128xf32>
      %78 = vector.shape_cast %74 : vector<8x128xf32> to vector<1x8x128xf32>
      tpu.vector_store %arg8[%75, %c0_36, %c0_37], %78 {strides = array<i32>} : memref<8x8x128xf32, #tpu.memory_space<vmem>>, vector<1x8x128xf32>,
    }
    return
  }
  func.func @transform_0(%arg0: i32, %arg1: memref<1xi32, #tpu.memory_space<smem>>) -> (i32, i32) {
    %c0_i32 = arith.constant 0 : i32
    %c0_i32_0 = arith.constant 0 : i32
    %c0_i32_1 = arith.constant 0 : i32
    return %c0_i32, %c0_i32_0 : i32, i32
  }
  func.func @transform_1(%arg0: i32, %arg1: memref<1xi32, #tpu.memory_space<smem>>) -> (i32, i32) {
    %c0_i32 = arith.constant 0 : i32
    %c0_i32_0 = arith.constant 0 : i32
    %c0_i32_1 = arith.constant 0 : i32
    return %c0_i32, %c0_i32_0 : i32, i32
  }
  func.func @transform_2(%arg0: i32, %arg1: memref<1xi32, #tpu.memory_space<smem>>) -> (i32, i32, i32) {
    %c0_i32 = arith.constant 0 : i32
    %c0_i32_0 = arith.constant 0 : i32
    %c0_i32_1 = arith.constant 0 : i32
    return %arg0, %c0_i32, %c0_i32_0 : i32, i32, i32
  }
  func.func @transform_3(%arg0: i32, %arg1: memref<1xi32, #tpu.memory_space<smem>>) -> (i32, i32, i32) {
    %c0_i32 = arith.constant 0 : i32
    %c0_i32_0 = arith.constant 0 : i32
    %c0_i32_1 = arith.constant 0 : i32
    return %arg0, %c0_i32, %c0_i32_0 : i32, i32, i32
  }
  func.func @transform_4(%arg0: i32, %arg1: memref<1xi32, #tpu.memory_space<smem>>) -> (i32, i32, i32) {
    %c0_i32 = arith.constant 0 : i32
    %c0_i32_0 = arith.constant 0 : i32
    %c0_i32_1 = arith.constant 0 : i32
    return %arg0, %c0_i32, %c0_i32_0 : i32, i32, i32
  }
  func.func @transform_5(%arg0: i32, %arg1: memref<1xi32, #tpu.memory_space<smem>>) -> (i32, i32, i32) {
    %c0_i32 = arith.constant 0 : i32
    %c0_i32_0 = arith.constant 0 : i32
    %c0_i32_1 = arith.constant 0 : i32
    return %arg0, %c0_i32, %c0_i32_0 : i32, i32, i32
  }
  func.func @transform_6(%arg0: i32, %arg1: memref<1xi32, #tpu.memory_space<smem>>) -> (i32, i32, i32) {
    %c0_i32 = arith.constant 0 : i32
    %c0_i32_0 = arith.constant 0 : i32
    %c0_i32_1 = arith.constant 0 : i32
    return %c0_i32, %c0_i32_0, %arg0 : i32, i32, i32
  }
}

module attributes {stable_mosaic.version = 11 : i64} {
  func.func @_combine_l2norm_kernel(%arg0: i32, %arg1: memref<8x8x256xf32, #tpu.memory_space<vmem>>, %arg2: memref<8x8x128xf32, #tpu.memory_space<vmem>>) attributes {dimension_semantics = [#tpu.dimension_semantics<parallel>], iteration_bounds = array<i64: 1>, scalar_prefetch = 0 : i64, scratch_operands = 0 : i64, tpu.core_type = #tpu.core_type<tc>, window_params = [{transform_indices = @transform_0, window_bounds = array<i64: 8, 8, 256>}, {transform_indices = @transform_1, window_bounds = array<i64: 8, 8, 128>}]} {
    %c0 = arith.constant 0 : index
    %c0_0 = arith.constant 0 : index
    %c0_1 = arith.constant 0 : index
    %0 = vector.load %arg1[%c0, %c0_0, %c0_1] : memref<8x8x256xf32, #tpu.memory_space<vmem>>, vector<8x8x128xf32>
    %c0_2 = arith.constant 0 : index
    %c0_3 = arith.constant 0 : index
    %c128 = arith.constant 128 : index
    %1 = vector.load %arg1[%c0_2, %c0_3, %c128] : memref<8x8x256xf32, #tpu.memory_space<vmem>>, vector<8x8x128xf32>
    %2 = arith.addf %0, %1 : vector<8x8x128xf32>
    %cst = arith.constant 5.000000e-01 : f32
    %3 = vector.broadcast %cst : f32 to vector<8x8x128xf32>
    %4 = arith.mulf %2, %3 : vector<8x8x128xf32>
    %5 = arith.mulf %4, %4 : vector<8x8x128xf32>
    %cst_4 = arith.constant dense<0.000000e+00> : vector<8x8xf32>
    %6 = vector.multi_reduction <add>, %5, %cst_4 [2] : vector<8x8x128xf32> to vector<8x8xf32>
    %7 = vector.shape_cast %6 : vector<8x8xf32> to vector<8x8x1xf32>
    %cst_5 = arith.constant 1.000000e-16 : f32
    %8 = vector.broadcast %cst_5 : f32 to vector<8x8x1xf32>
    %9 = arith.addf %7, %8 : vector<8x8x1xf32>
    %10 = math.rsqrt %9 : vector<8x8x1xf32>
    %11 = vector.broadcast %10 : vector<8x8x1xf32> to vector<8x8x128xf32>
    %12 = arith.mulf %4, %11 : vector<8x8x128xf32>
    %c0_6 = arith.constant 0 : index
    %c0_7 = arith.constant 0 : index
    %c0_8 = arith.constant 0 : index
    %13 = vector.load %arg2[%c0_6, %c0_7, %c0_8] : memref<8x8x128xf32, #tpu.memory_space<vmem>>, vector<8x8x128xf32>
    tpu.vector_store %arg2[%c0_6, %c0_7, %c0_8], %12 {strides = array<i32>} : memref<8x8x128xf32, #tpu.memory_space<vmem>>, vector<8x8x128xf32>,
    return
  }
  func.func @transform_0(%arg0: i32) -> (i32, i32, i32) {
    %c0_i32 = arith.constant 0 : i32
    %c0_i32_0 = arith.constant 0 : i32
    %c0_i32_1 = arith.constant 0 : i32
    return %arg0, %c0_i32, %c0_i32_0 : i32, i32, i32
  }
  func.func @transform_1(%arg0: i32) -> (i32, i32, i32) {
    %c0_i32 = arith.constant 0 : i32
    %c0_i32_0 = arith.constant 0 : i32
    %c0_i32_1 = arith.constant 0 : i32
    return %arg0, %c0_i32, %c0_i32_0 : i32, i32, i32
  }
}

module attributes {stable_mosaic.version = 11 : i64} {
  func.func @_bigru_layer_kernel(%arg0: i32, %arg1: memref<1xi32, #tpu.memory_space<smem>>, %arg2: memref<64x256xf32, #tpu.memory_space<vmem>>, %arg3: memref<8x1xi32, #tpu.memory_space<vmem>>, %arg4: memref<1x256x384xf32, #tpu.memory_space<vmem>>, %arg5: memref<1x128x384xf32, #tpu.memory_space<vmem>>, %arg6: memref<1x1x384xf32, #tpu.memory_space<vmem>>, %arg7: memref<1x1x128xf32, #tpu.memory_space<vmem>>, %arg8: memref<8x8x128xf32, #tpu.memory_space<vmem>>, %arg9: memref<64x384xf32, #tpu.memory_space<vmem>>, %arg10: memref<8x128xf32, #tpu.memory_space<vmem>>) attributes {dimension_semantics = [#tpu.dimension_semantics<parallel>], iteration_bounds = array<i64: 2>, scalar_prefetch = 1 : i64, scratch_operands = 2 : i64, tpu.core_type = #tpu.core_type<tc>, window_params = [{pipeline_mode = #tpu.pipeline_mode<synchronous>, transform_indices = @transform_0, window_bounds = array<i64: 64, 256>}, {pipeline_mode = #tpu.pipeline_mode<synchronous>, transform_indices = @transform_1, window_bounds = array<i64: 8, 1>}, {transform_indices = @transform_2, window_bounds = array<i64: 1, 256, 384>}, {transform_indices = @transform_3, window_bounds = array<i64: 1, 128, 384>}, {transform_indices = @transform_4, window_bounds = array<i64: 1, 1, 384>}, {transform_indices = @transform_5, window_bounds = array<i64: 1, 1, 128>}, {transform_indices = @transform_6, window_bounds = array<i64: 8, 8, 128>}]} {
    %c0 = arith.constant 0 : index
    %0 = memref.load %arg1[%c0] : memref<1xi32, #tpu.memory_space<smem>>
    %c0_0 = arith.constant 0 : index
    %c0_1 = arith.constant 0 : index
    %1 = vector.load %arg2[%c0_0, %c0_1] : memref<64x256xf32, #tpu.memory_space<vmem>>, vector<64x256xf32>
    %c0_2 = arith.constant 0 : index
    %c0_3 = arith.constant 0 : index
    %c0_4 = arith.constant 0 : index
    %2 = vector.load %arg4[%c0_2, %c0_3, %c0_4] : memref<1x256x384xf32, #tpu.memory_space<vmem>>, vector<1x256x384xf32>
    %3 = vector.shape_cast %2 : vector<1x256x384xf32> to vector<256x384xf32>
    %cst = arith.constant dense<0.000000e+00> : vector<64x384xf32>
    %4 = tpu.matmul %1, %3, %cst {dimension_numbers = #tpu.dot_dimension_numbers<[1], [0], [0], [1], [0, 0, 1, 1], [], []>} : vector<64x256xf32>, vector<256x384xf32>, vector<64x384xf32> -> vector<64x384xf32>
    %c0_5 = arith.constant 0 : index
    %c0_6 = arith.constant 0 : index
    %c0_7 = arith.constant 0 : index
    %5 = vector.load %arg6[%c0_5, %c0_6, %c0_7] : memref<1x1x384xf32, #tpu.memory_space<vmem>>, vector<1x1x384xf32>
    %6 = vector.shape_cast %5 : vector<1x1x384xf32> to vector<1x384xf32>
    %7 = vector.broadcast %6 : vector<1x384xf32> to vector<64x384xf32>
    %8 = arith.addf %4, %7 : vector<64x384xf32>
    %c0_8 = arith.constant 0 : index
    %c0_9 = arith.constant 0 : index
    %9 = vector.load %arg9[%c0_8, %c0_9] : memref<64x384xf32, #tpu.memory_space<vmem>>, vector<64x384xf32>
    tpu.vector_store %arg9[%c0_8, %c0_9], %8 {strides = array<i32>} : memref<64x384xf32, #tpu.memory_space<vmem>>, vector<64x384xf32>,
    %cst_10 = arith.constant 0.000000e+00 : f32
    %10 = vector.broadcast %cst_10 : f32 to vector<8x128xf32>
    %c0_11 = arith.constant 0 : index
    %c0_12 = arith.constant 0 : index
    %11 = vector.load %arg10[%c0_11, %c0_12] : memref<8x128xf32, #tpu.memory_space<vmem>>, vector<8x128xf32>
    tpu.vector_store %arg10[%c0_11, %c0_12], %10 {strides = array<i32>} : memref<8x128xf32, #tpu.memory_space<vmem>>, vector<8x128xf32>,
    %c8_i32 = arith.constant 8 : i32
    %12 = arith.cmpi slt, %0, %c8_i32 : i32
    %13 = arith.extui %12 : i1 to i32
    %c0_i32 = arith.constant 0 : i32
    %14 = arith.cmpi ne, %13, %c0_i32 : i32
    scf.if %14 {
      %cst_20 = arith.constant 0.000000e+00 : f32
      %22 = vector.broadcast %cst_20 : f32 to vector<8x8x128xf32>
      %c0_21 = arith.constant 0 : index
      %c0_22 = arith.constant 0 : index
      %c0_23 = arith.constant 0 : index
      %23 = vector.load %arg8[%c0_21, %c0_22, %c0_23] : memref<8x8x128xf32, #tpu.memory_space<vmem>>, vector<8x8x128xf32>
      tpu.vector_store %arg8[%c0_21, %c0_22, %c0_23], %22 {strides = array<i32>} : memref<8x8x128xf32, #tpu.memory_space<vmem>>, vector<8x8x128xf32>,
    } else {
    }
    %c0_13 = arith.constant 0 : index
    %c0_14 = arith.constant 0 : index
    %15 = vector.load %arg3[%c0_13, %c0_14] : memref<8x1xi32, #tpu.memory_space<vmem>>, vector<8x1xi32>
    %c0_15 = arith.constant 0 : index
    %c0_16 = arith.constant 0 : index
    %c0_17 = arith.constant 0 : index
    %16 = vector.load %arg7[%c0_15, %c0_16, %c0_17] : memref<1x1x128xf32, #tpu.memory_space<vmem>>, vector<1x1x128xf32>
    %17 = vector.shape_cast %16 : vector<1x1x128xf32> to vector<1x128xf32>
    %18 = vector.shape_cast %17 : vector<1x128xf32> to vector<1x128xf32>
    %19 = vector.broadcast %18 : vector<1x128xf32> to vector<8x128xf32>
    %c0_i32_18 = arith.constant 0 : i32
    %c0_i32_19 = arith.constant 0 : i32
    %20 = arith.subi %0, %c0_i32_19 : i32
    %21 = arith.addi %c0_i32_19, %20 : i32
    %c1_i32 = arith.constant 1 : i32
    scf.for %arg11 = %c0_i32_19 to %21 step %c1_i32  : i32 {
      %c0_i32_20 = arith.constant 0 : i32
      %22 = arith.cmpi eq, %arg0, %c0_i32_20 : i32
      %c1_i32_21 = arith.constant 1 : i32
      %23 = arith.subi %0, %c1_i32_21 : i32
      %24 = arith.subi %23, %arg11 : i32
      %25 = arith.select %22, %arg11, %24 : i32
      %c8_i32_22 = arith.constant 8 : i32
      %26 = arith.muli %25, %c8_i32_22 : i32
      %27 = tpu.assume_multiple %26, 8 : i32
      %28 = arith.index_cast %27 : i32 to index
      %c0_23 = arith.constant 0 : index
      %29 = vector.load %arg9[%28, %c0_23] : memref<64x384xf32, #tpu.memory_space<vmem>>, vector<8x384xf32>
      %c0_24 = arith.constant 0 : index
      %c0_25 = arith.constant 0 : index
      %30 = vector.load %arg10[%c0_24, %c0_25] : memref<8x128xf32, #tpu.memory_space<vmem>>, vector<8x128xf32>
      %c0_26 = arith.constant 0 : index
      %c0_27 = arith.constant 0 : index
      %c0_28 = arith.constant 0 : index
      %31 = vector.load %arg5[%c0_26, %c0_27, %c0_28] : memref<1x128x384xf32, #tpu.memory_space<vmem>>, vector<1x128x384xf32>
      %32 = vector.shape_cast %31 : vector<1x128x384xf32> to vector<128x384xf32>
      %cst_29 = arith.constant dense<0.000000e+00> : vector<8x384xf32>
      %33 = tpu.matmul %30, %32, %cst_29 {dimension_numbers = #tpu.dot_dimension_numbers<[1], [0], [0], [1], [0, 0, 1, 1], [], []>} : vector<8x128xf32>, vector<128x384xf32>, vector<8x384xf32> -> vector<8x384xf32>
      %34 = vector.extract_strided_slice %29 {offsets = [0, 0], sizes = [8, 128], strides = [1, 1]} : vector<8x384xf32> to vector<8x128xf32>
      %35 = vector.extract_strided_slice %33 {offsets = [0, 0], sizes = [8, 128], strides = [1, 1]} : vector<8x384xf32> to vector<8x128xf32>
      %36 = arith.addf %34, %35 : vector<8x128xf32>
      %37 = arith.negf %36 : vector<8x128xf32>
      %38 = math.exp %37 : vector<8x128xf32>
      %cst_30 = arith.constant 1.000000e+00 : f32
      %39 = vector.broadcast %cst_30 : f32 to vector<8x128xf32>
      %40 = arith.addf %39, %38 : vector<8x128xf32>
      %41 = arith.divf %39, %40 : vector<8x128xf32>
      %42 = vector.extract_strided_slice %29 {offsets = [0, 128], sizes = [8, 128], strides = [1, 1]} : vector<8x384xf32> to vector<8x128xf32>
      %43 = vector.extract_strided_slice %33 {offsets = [0, 128], sizes = [8, 128], strides = [1, 1]} : vector<8x384xf32> to vector<8x128xf32>
      %44 = arith.addf %42, %43 : vector<8x128xf32>
      %45 = arith.negf %44 : vector<8x128xf32>
      %46 = math.exp %45 : vector<8x128xf32>
      %cst_31 = arith.constant 1.000000e+00 : f32
      %47 = vector.broadcast %cst_31 : f32 to vector<8x128xf32>
      %48 = arith.addf %47, %46 : vector<8x128xf32>
      %49 = arith.divf %47, %48 : vector<8x128xf32>
      %50 = vector.extract_strided_slice %29 {offsets = [0, 256], sizes = [8, 128], strides = [1, 1]} : vector<8x384xf32> to vector<8x128xf32>
      %51 = vector.extract_strided_slice %33 {offsets = [0, 256], sizes = [8, 128], strides = [1, 1]} : vector<8x384xf32> to vector<8x128xf32>
      %52 = arith.addf %51, %19 : vector<8x128xf32>
      %53 = arith.mulf %41, %52 : vector<8x128xf32>
      %54 = arith.addf %50, %53 : vector<8x128xf32>
      %55 = math.tanh %54 : vector<8x128xf32>
      %cst_32 = arith.constant 1.000000e+00 : f32
      %56 = vector.broadcast %cst_32 : f32 to vector<8x128xf32>
      %57 = arith.subf %56, %49 : vector<8x128xf32>
      %58 = arith.mulf %57, %55 : vector<8x128xf32>
      %59 = arith.mulf %49, %30 : vector<8x128xf32>
      %60 = arith.addf %58, %59 : vector<8x128xf32>
      %61 = vector.broadcast %25 : i32 to vector<8x1xi32>
      %62 = arith.cmpi slt, %61, %15 : vector<8x1xi32>
      %63 = arith.extui %62 : vector<8x1xi1> to vector<8x1xi32>
      %64 = arith.sitofp %63 : vector<8x1xi32> to vector<8x1xf32>
      %65 = vector.broadcast %64 : vector<8x1xf32> to vector<8x128xf32>
      %66 = arith.mulf %65, %60 : vector<8x128xf32>
      %cst_33 = arith.constant 1.000000e+00 : f32
      %67 = vector.broadcast %cst_33 : f32 to vector<8x1xf32>
      %68 = arith.subf %67, %64 : vector<8x1xf32>
      %69 = vector.broadcast %68 : vector<8x1xf32> to vector<8x128xf32>
      %70 = arith.mulf %69, %30 : vector<8x128xf32>
      %71 = arith.addf %66, %70 : vector<8x128xf32>
      %c0_34 = arith.constant 0 : index
      %c0_35 = arith.constant 0 : index
      %72 = vector.load %arg10[%c0_34, %c0_35] : memref<8x128xf32, #tpu.memory_space<vmem>>, vector<8x128xf32>
      tpu.vector_store %arg10[%c0_34, %c0_35], %71 {strides = array<i32>} : memref<8x128xf32, #tpu.memory_space<vmem>>, vector<8x128xf32>,
      %73 = vector.broadcast %64 : vector<8x1xf32> to vector<8x128xf32>
      %74 = arith.mulf %73, %60 : vector<8x128xf32>
      %75 = arith.index_cast %25 : i32 to index
      %c0_36 = arith.constant 0 : index
      %c0_37 = arith.constant 0 : index
      %76 = vector.load %arg8[%75, %c0_36, %c0_37] : memref<8x8x128xf32, #tpu.memory_space<vmem>>, vector<1x8x128xf32>
      %77 = vector.shape_cast %76 : vector<1x8x128xf32> to vector<8x128xf32>
      %78 = vector.shape_cast %74 : vector<8x128xf32> to vector<1x8x128xf32>
      tpu.vector_store %arg8[%75, %c0_36, %c0_37], %78 {strides = array<i32>} : memref<8x8x128xf32, #tpu.memory_space<vmem>>, vector<1x8x128xf32>,
    }
    return
  }
  func.func @transform_0(%arg0: i32, %arg1: memref<1xi32, #tpu.memory_space<smem>>) -> (i32, i32) {
    %c0_i32 = arith.constant 0 : i32
    %c0_i32_0 = arith.constant 0 : i32
    %c0_i32_1 = arith.constant 0 : i32
    return %c0_i32, %c0_i32_0 : i32, i32
  }
  func.func @transform_1(%arg0: i32, %arg1: memref<1xi32, #tpu.memory_space<smem>>) -> (i32, i32) {
    %c0_i32 = arith.constant 0 : i32
    %c0_i32_0 = arith.constant 0 : i32
    %c0_i32_1 = arith.constant 0 : i32
    return %c0_i32, %c0_i32_0 : i32, i32
  }
  func.func @transform_2(%arg0: i32, %arg1: memref<1xi32, #tpu.memory_space<smem>>) -> (i32, i32, i32) {
    %c0_i32 = arith.constant 0 : i32
    %c0_i32_0 = arith.constant 0 : i32
    %c0_i32_1 = arith.constant 0 : i32
    return %arg0, %c0_i32, %c0_i32_0 : i32, i32, i32
  }
  func.func @transform_3(%arg0: i32, %arg1: memref<1xi32, #tpu.memory_space<smem>>) -> (i32, i32, i32) {
    %c0_i32 = arith.constant 0 : i32
    %c0_i32_0 = arith.constant 0 : i32
    %c0_i32_1 = arith.constant 0 : i32
    return %arg0, %c0_i32, %c0_i32_0 : i32, i32, i32
  }
  func.func @transform_4(%arg0: i32, %arg1: memref<1xi32, #tpu.memory_space<smem>>) -> (i32, i32, i32) {
    %c0_i32 = arith.constant 0 : i32
    %c0_i32_0 = arith.constant 0 : i32
    %c0_i32_1 = arith.constant 0 : i32
    return %arg0, %c0_i32, %c0_i32_0 : i32, i32, i32
  }
  func.func @transform_5(%arg0: i32, %arg1: memref<1xi32, #tpu.memory_space<smem>>) -> (i32, i32, i32) {
    %c0_i32 = arith.constant 0 : i32
    %c0_i32_0 = arith.constant 0 : i32
    %c0_i32_1 = arith.constant 0 : i32
    return %arg0, %c0_i32, %c0_i32_0 : i32, i32, i32
  }
  func.func @transform_6(%arg0: i32, %arg1: memref<1xi32, #tpu.memory_space<smem>>) -> (i32, i32, i32) {
    %c0_i32 = arith.constant 0 : i32
    %c0_i32_0 = arith.constant 0 : i32
    %c0_i32_1 = arith.constant 0 : i32
    return %c0_i32, %c0_i32_0, %arg0 : i32, i32, i32
  }
}

</mosaic_0001>

<llo_original>
// kernel: encoder_text_forward.5
$region0: #{encoder_text_forward.5}
  #allocation0 [shape = 'u32[]', space=smem, size = 0x4, offset = 0x4, fixed_abs, tag = 'smem constant byte address 0x4 - core index']
  #allocation1 [shape = 'u32[72,128]{1,0:T(1,128)}', space=vmem, size = 0x9000, scoped, tag = 'internal scratch']
  %s0 = inlined_call_operand.vmem [shape: f32[8,8,256], index: 0, kind: input, shape index: {}]
  %s1 = inlined_call_operand.vmem [shape: f32[8,8,128], index: 1, kind: output, shape index: {}]
  %s2 = sld [smem:[#allocation0]]
  $region14: #{encoder_text_forward.5} parent=0
    _
  %s4 = ssub.s32 1, %s2
  %s5 = scalar_select 0, %s4, %s2
  // Predicated region
  $region2: #{encoder_text_forward.5} parent=0 // pred_check
    _
  $region3: #{encoder_text_forward.5} parent=0 // pred_check_branch
    %7 = sbr.rel (0) target = $region5
  $region4: #{encoder_text_forward.5} parent=0 // pred_region
    _
  $region5: #{encoder_text_forward.5} parent=0 // pred_fallthru
    _
  %v8 = vld [vmem:[%s0] sm:$0xff]
  %v9 = vld [vmem:[%s0 + $0x10] sm:$0xff]
  %v10 = vld [vmem:[%s0 + $0x20] sm:$0xff]
  %v11 = vld [vmem:[%s0 + $0x30] sm:$0xff]
  %v12 = vld [vmem:[%s0 + $0x40] sm:$0xff]
  %v13 = vld [vmem:[%s0 + $0x50] sm:$0xff]
  %v14 = vld [vmem:[%s0 + $0x60] sm:$0xff]
  %v15 = vld [vmem:[%s0 + $0x70] sm:$0xff]
  %v16 = vld [vmem:[%s0 + $0x8] sm:$0xff]
  %v17 = vld [vmem:[%s0 + $0x18] sm:$0xff]
  %v18 = vld [vmem:[%s0 + $0x28] sm:$0xff]
  %v19 = vld [vmem:[%s0 + $0x38] sm:$0xff]
  %v20 = vld [vmem:[%s0 + $0x48] sm:$0xff]
  %v21 = vld [vmem:[%s0 + $0x58] sm:$0xff]
  %v22 = vld [vmem:[%s0 + $0x68] sm:$0xff]
  %v23 = vld [vmem:[%s0 + $0x78] sm:$0xff]
  %v24 = vadd.f32 %v8, %v16
  %v25 = vadd.f32 %v9, %v17
  %v26 = vadd.f32 %v10, %v18
  %v27 = vadd.f32 %v11, %v19
  %v28 = vadd.f32 %v12, %v20
  %v29 = vadd.f32 %v13, %v21
  %v30 = vadd.f32 %v14, %v22
  %v31 = vadd.f32 %v15, %v23
  %v32 = vmul.f32 %v24, 0.5
  %v33 = vmul.f32 %v25, 0.5
  %v34 = vmul.f32 %v26, 0.5
  %v35 = vmul.f32 %v27, 0.5
  %v36 = vmul.f32 %v28, 0.5
  %v37 = vmul.f32 %v29, 0.5
  %v38 = vmul.f32 %v30, 0.5
  %v39 = vmul.f32 %v31, 0.5
  %v40 = vmul.f32 %v32, %v32
  %v41 = vmul.f32 %v33, %v33
  %v42 = vmul.f32 %v34, %v34
  %v43 = vmul.f32 %v35, %v35
  %v44 = vmul.f32 %v36, %v36
  %v45 = vmul.f32 %v37, %v37
  %v46 = vmul.f32 %v38, %v38
  %v47 = vmul.f32 %v39, %v39
  %48 = vadd.xlane.f32.xlu0 %v40
  %v49 = vpop.xlane.xlu0 %48
  %50 = vadd.xlane.f32.xlu0 %v41
  %v51 = vpop.xlane.xlu0 %50
  %52 = vadd.xlane.f32.xlu0 %v42
  %v53 = vpop.xlane.xlu0 %52
  %54 = vadd.xlane.f32.xlu0 %v43
  %v55 = vpop.xlane.xlu0 %54
  %56 = vadd.xlane.f32.xlu0 %v44
  %v57 = vpop.xlane.xlu0 %56
  %58 = vadd.xlane.f32.xlu0 %v45
  %v59 = vpop.xlane.xlu0 %58
  %60 = vadd.xlane.f32.xlu0 %v46
  %v61 = vpop.xlane.xlu0 %60
  %62 = vadd.xlane.f32.xlu0 %v47
  %v63 = vpop.xlane.xlu0 %62
  %v64 = vadd.f32 %v49, 1e-16
  %v65 = vadd.f32 %v51, 1e-16
  %v66 = vadd.f32 %v53, 1e-16
  %v67 = vadd.f32 %v55, 1e-16
  %v68 = vadd.f32 %v57, 1e-16
  %v69 = vadd.f32 %v59, 1e-16
  %v70 = vadd.f32 %v61, 1e-16
  %v71 = vadd.f32 %v63, 1e-16
  %v72 = vrsqrt.pop %v64
  %v73 = vmul.f32 %v72, %v64
  %v74 = vmul.f32 %v73, %v72
  %v75 = vmul.f32 0.5, %v74
  %v76 = vsub.f32 1.5, %v75
  %v77 = vmul.f32 %v72, %v76
  %vm78 = vweird.f32 %v64
  %vm79 = vweird.f32 %v72
  %vm80 = vmor %vm78, %vm79
  %v81 = vsel %vm80, %v72, %v77
  %v82 = vrsqrt.pop %v65
  %v83 = vmul.f32 %v82, %v65
  %v84 = vmul.f32 %v83, %v82
  %v85 = vmul.f32 0.5, %v84
  %v86 = vsub.f32 1.5, %v85
  %v87 = vmul.f32 %v82, %v86
  %vm88 = vweird.f32 %v65
  %vm89 = vweird.f32 %v82
  %vm90 = vmor %vm88, %vm89
  %v91 = vsel %vm90, %v82, %v87
  %v92 = vrsqrt.pop %v66
  %v93 = vmul.f32 %v92, %v66
  %v94 = vmul.f32 %v93, %v92
  %v95 = vmul.f32 0.5, %v94
  %v96 = vsub.f32 1.5, %v95
  %v97 = vmul.f32 %v92, %v96
  %vm98 = vweird.f32 %v66
  %vm99 = vweird.f32 %v92
  %vm100 = vmor %vm98, %vm99
  %v101 = vsel %vm100, %v92, %v97
  %v102 = vrsqrt.pop %v67
  %v103 = vmul.f32 %v102, %v67
  %v104 = vmul.f32 %v103, %v102
  %v105 = vmul.f32 0.5, %v104
  %v106 = vsub.f32 1.5, %v105
  %v107 = vmul.f32 %v102, %v106
  %vm108 = vweird.f32 %v67
  %vm109 = vweird.f32 %v102
  %vm110 = vmor %vm108, %vm109
  %v111 = vsel %vm110, %v102, %v107
  %v112 = vrsqrt.pop %v68
  %v113 = vmul.f32 %v112, %v68
  %v114 = vmul.f32 %v113, %v112
  %v115 = vmul.f32 0.5, %v114
  %v116 = vsub.f32 1.5, %v115
  %v117 = vmul.f32 %v112, %v116
  %vm118 = vweird.f32 %v68
  %vm119 = vweird.f32 %v112
  %vm120 = vmor %vm118, %vm119
  %v121 = vsel %vm120, %v112, %v117
  %v122 = vrsqrt.pop %v69
  %v123 = vmul.f32 %v122, %v69
  %v124 = vmul.f32 %v123, %v122
  %v125 = vmul.f32 0.5, %v124
  %v126 = vsub.f32 1.5, %v125
  %v127 = vmul.f32 %v122, %v126
  %vm128 = vweird.f32 %v69
  %vm129 = vweird.f32 %v122
  %vm130 = vmor %vm128, %vm129
  %v131 = vsel %vm130, %v122, %v127
  %v132 = vrsqrt.pop %v70
  %v133 = vmul.f32 %v132, %v70
  %v134 = vmul.f32 %v133, %v132
  %v135 = vmul.f32 0.5, %v134
  %v136 = vsub.f32 1.5, %v135
  %v137 = vmul.f32 %v132, %v136
  %vm138 = vweird.f32 %v70
  %vm139 = vweird.f32 %v132
  %vm140 = vmor %vm138, %vm139
  %v141 = vsel %vm140, %v132, %v137
  %v142 = vrsqrt.pop %v71
  %v143 = vmul.f32 %v142, %v71
  %v144 = vmul.f32 %v143, %v142
  %v145 = vmul.f32 0.5, %v144
  %v146 = vsub.f32 1.5, %v145
  %v147 = vmul.f32 %v142, %v146
  %vm148 = vweird.f32 %v71
  %vm149 = vweird.f32 %v142
  %vm150 = vmor %vm148, %vm149
  %v151 = vsel %vm150, %v142, %v147
  %v152 = vmul.f32 %v32, %v81
  %v153 = vmul.f32 %v33, %v91
  %v154 = vmul.f32 %v34, %v101
  %v155 = vmul.f32 %v35, %v111
  %v156 = vmul.f32 %v36, %v121
  %v157 = vmul.f32 %v37, %v131
  %v158 = vmul.f32 %v38, %v141
  %v159 = vmul.f32 %v39, %v151
  %160 = vst [vmem:[%s1] sm:$0xff] %v152
  %161 = vst [vmem:[%s1 + $0x8] sm:$0xff] %v153
  %162 = vst [vmem:[%s1 + $0x10] sm:$0xff] %v154
  %163 = vst [vmem:[%s1 + $0x18] sm:$0xff] %v155
  %164 = vst [vmem:[%s1 + $0x20] sm:$0xff] %v156
  %165 = vst [vmem:[%s1 + $0x28] sm:$0xff] %v157
  %166 = vst [vmem:[%s1 + $0x30] sm:$0xff] %v158
  %167 = vst [vmem:[%s1 + $0x38] sm:$0xff] %v159
  // Predicated region
  $region6: #{encoder_text_forward.5} parent=0 // pred_check
    _
  $region7: #{encoder_text_forward.5} parent=0 // pred_check_branch
    %169 = sbr.rel (0) target = $region9
  $region8: #{encoder_text_forward.5} parent=0 // pred_region
    _
  $region9: #{encoder_text_forward.5} parent=0 // pred_fallthru
    _
  // Predicated region
  $region10: #{encoder_text_forward.5} parent=0 // pred_check
    _
  $region11: #{encoder_text_forward.5} parent=0 // pred_check_branch
    %171 = sbr.rel (0) target = $region13
  $region12: #{encoder_text_forward.5} parent=0 // pred_region
    _
  $region13: #{encoder_text_forward.5} parent=0 // pred_fallthru
    _

// kernel: encoder_text_forward.3
$region0: #{encoder_text_forward.3}
  #allocation0 [shape = 'u32[]', space=smem, size = 0x4, offset = 0x4, fixed_abs, tag = 'smem constant byte address 0x4 - core index']
  #allocation1 [shape = 'u32[72,128]{1,0:T(1,128)}', space=vmem, size = 0x9000, scoped, tag = 'internal scratch']
  #allocation2 [shape = 'f32[64,384]{1,0:T(8,128)}', space=vmem, size = 0x18000, scoped, tag = 'scratch operand']
  #allocation3 [shape = 'f32[8,128]{1,0:T(8,128)}', space=vmem, size = 0x1000, scoped, tag = 'scratch operand']
  #allocation4 [shape = 's32[1]{0}', space=sflag, size = 0x4, scoped, tag = 'scoped memory for encoder_text_forward.3']
  #allocation5 [shape = 's32[1]{0:T(128)S(6)}', space=smem, size = 0x200, scoped, tag = 'prefetched SMEM operand 0']
  %s0 = inlined_call_operand.<no memory space> [shape: s32[1], index: 0, kind: input, shape index: {}]
  %s1 = inlined_call_operand.vmem [shape: f32[64,128], index: 1, kind: input, shape index: {}]
  %s2 = inlined_call_operand.vmem [shape: s32[8,1], index: 2, kind: input, shape index: {}]
  %s3 = inlined_call_operand.hbm [shape: f32[2,128,384], index: 3, kind: input, shape index: {}]
  %s4 = inlined_call_operand.hbm [shape: f32[2,128,384], index: 4, kind: input, shape index: {}]
  %s5 = inlined_call_operand.vmem [shape: f32[2,1,384], index: 5, kind: input, shape index: {}]
  %s6 = inlined_call_operand.vmem [shape: f32[2,1,128], index: 6, kind: input, shape index: {}]
  %s7 = inlined_call_operand.vmem [shape: f32[8,8,256], index: 7, kind: output, shape index: {}]
  %s8 = sld [smem:[#allocation0]]
  $region110: #{encoder_text_forward.3} parent=0
    _
  %s10 = ssub.s32 1, %s8
  %s11 = scalar_select 0, %s10, %s8
  %12 = sst [smem:[#allocation5]] %s0
  $region1: #{encoder_text_forward.3} parent=0
    #allocation6 [shape = 'u8[393216]{0}', space=vmem, size = 0x60000, scoped, tag = 'input window, operand 3']
    #allocation7 [shape = 's32[2]{0}', space=sflag, size = 0x8, scoped, tag = 'scoped memory for encoder_text_forward.3']
    #allocation8 [shape = 'u8[393216]{0}', space=vmem, size = 0x60000, scoped, tag = 'input window, operand 4']
    #allocation9 [shape = 's32[2]{0}', space=sflag, size = 0x8, scoped, tag = 'scoped memory for encoder_text_forward.3']
    #allocation10 [shape = 'u8[65536]{0}', space=vmem, size = 0x10000, scoped, tag = 'output window, operand 0']
    %13 = vsyncpa [#allocation7], 0
    %s14 = scalar_lea.sflag [#allocation7], 1
    %15 = vsyncpa %s14, 0
    %16 = vsyncpa [#allocation9], 0
    %s17 = scalar_lea.sflag [#allocation9], 1
    %18 = vsyncpa %s17, 0
    loop: start=0, step=1, limit=4
    $region2: #{encoder_text_forward.3} parent=1 // loop_pre_header
      _
    $region3: #{encoder_text_forward.3} parent=1 // loop_header
      %s20 = sphi 0, %s24
      %p21 = scmp.ge.s32.totalorder %s20, 4
      %s28 = sphi 0, %s28
      %s30 = sphi 0, %s28
      %s31 = sphi 0, %s30
      %s45 = sphi 0, %s31
      %s49 = sphi 0, %s49
      %s51 = sphi 0, %s49
      %s52 = sphi 0, %s51
      %s66 = sphi 0, %s52
      %s72 = sphi 0, %s74
      %s75 = sphi 0, %s72
      %s76 = sphi 0, %s75
      %s92 = sphi 0, %s76
      %s98 = sphi 0, %s100
      %s101 = sphi 0, %s98
      %s102 = sphi 0, %s101
      %s118 = sphi 0, %s102
      %s124 = sphi 0, %s126
      %s127 = sphi 0, %s124
      %s128 = sphi 0, %s127
      %s144 = sphi 0, %s128
      %s150 = sphi 0, %s152
      %s153 = sphi 0, %s150
      %s154 = sphi 0, %s153
      %s170 = sphi 0, %s154
      %s176 = sphi 0, %s178
      %s179 = sphi 0, %s176
      %s180 = sphi 0, %s179
      %s196 = sphi 0, %s180
    $region4: #{encoder_text_forward.3} parent=1 // loop_header_branch
      %23 = sbr.rel (%p21) target = $region8
    $region5: #{encoder_text_forward.3} parent=1 // loop_body
      %s25 = ssub.s32 %s20, 1
      %s26 = ssub.s32 %s20, 2
      %s27 = sadd.s32 %s20, 1
      %s29 = sadd.s32 %s28, 1
      %p32 = scmp.eq.s32.totalorder %s20, 1
      %p33 = scmp.ne.s32.totalorder %s28, %s30
      %p34 = scmp.eq.s32.totalorder %s20, 0
      %p35 = por %p33, %p34
      %p36 = scmp.ne.s32.totalorder %s28, %s30
      %p37 = scmp.eq.s32.totalorder %s25, 1
      %p38 = por %p36, %p37
      %p39 = scmp.ne.s32.totalorder %s30, %s31
      %p40 = scmp.eq.s32.totalorder %s25, 0
      %p41 = por %p39, %p40
      %p42 = scmp.ne.s32.totalorder %s30, %s31
      %p43 = scmp.eq.s32.totalorder %s26, 1
      %p44 = por %p42, %p43
      %p46 = scmp.ne.s32.totalorder %s31, %s45
      %p47 = scmp.eq.s32.totalorder %s26, 0
      %p48 = por %p46, %p47
      %s50 = sadd.s32 %s49, 1
      %p53 = scmp.eq.s32.totalorder %s20, 1
      %p54 = scmp.ne.s32.totalorder %s49, %s51
      %p55 = scmp.eq.s32.totalorder %s20, 0
      %p56 = por %p54, %p55
      %p57 = scmp.ne.s32.totalorder %s49, %s51
      %p58 = scmp.eq.s32.totalorder %s25, 1
      %p59 = por %p57, %p58
      %p60 = scmp.ne.s32.totalorder %s51, %s52
      %p61 = scmp.eq.s32.totalorder %s25, 0
      %p62 = por %p60, %p61
      %p63 = scmp.ne.s32.totalorder %s51, %s52
      %p64 = scmp.eq.s32.totalorder %s26, 1
      %p65 = por %p63, %p64
      %p67 = scmp.ne.s32.totalorder %s52, %s66
      %p68 = scmp.eq.s32.totalorder %s26, 0
      %p69 = por %p67, %p68
      %s70 = ssub.s32 %s20, %s27
      %p71 = scmp.eq.s32.totalorder %s70, 0
      %s73 = sadd.s32 %s72, 1
      %s74 = scalar_select %p71, %s72, %s73
      %p77 = pneg %p71
      %p78 = scmp.eq.s32.totalorder %s20, 1
      %p79 = por %p77, %p78
      %p80 = scmp.ne.s32.totalorder %s72, %s75
      %p81 = scmp.eq.s32.totalorder %s20, 0
      %p82 = por %p80, %p81
      %p83 = scmp.ne.s32.totalorder %s72, %s75
      %p84 = scmp.eq.s32.totalorder %s25, 1
      %p85 = por %p83, %p84
      %p86 = scmp.ne.s32.totalorder %s75, %s76
      %p87 = scmp.eq.s32.totalorder %s25, 0
      %p88 = por %p86, %p87
      %p89 = scmp.ne.s32.totalorder %s75, %s76
      %p90 = scmp.eq.s32.totalorder %s26, 1
      %p91 = por %p89, %p90
      %p93 = scmp.ne.s32.totalorder %s76, %s92
      %p94 = scmp.eq.s32.totalorder %s26, 0
      %p95 = por %p93, %p94
      %s96 = ssub.s32 %s20, %s27
      %p97 = scmp.eq.s32.totalorder %s96, 0
      %s99 = sadd.s32 %s98, 1
      %s100 = scalar_select %p97, %s98, %s99
      %p103 = pneg %p97
      %p104 = scmp.eq.s32.totalorder %s20, 1
      %p105 = por %p103, %p104
      %p106 = scmp.ne.s32.totalorder %s98, %s101
      %p107 = scmp.eq.s32.totalorder %s20, 0
      %p108 = por %p106, %p107
      %p109 = scmp.ne.s32.totalorder %s98, %s101
      %p110 = scmp.eq.s32.totalorder %s25, 1
      %p111 = por %p109, %p110
      %p112 = scmp.ne.s32.totalorder %s101, %s102
      %p113 = scmp.eq.s32.totalorder %s25, 0
      %p114 = por %p112, %p113
      %p115 = scmp.ne.s32.totalorder %s101, %s102
      %p116 = scmp.eq.s32.totalorder %s26, 1
      %p117 = por %p115, %p116
      %p119 = scmp.ne.s32.totalorder %s102, %s118
      %p120 = scmp.eq.s32.totalorder %s26, 0
      %p121 = por %p119, %p120
      %s122 = ssub.s32 %s20, %s27
      %p123 = scmp.eq.s32.totalorder %s122, 0
      %s125 = sadd.s32 %s124, 1
      %s126 = scalar_select %p123, %s124, %s125
      %p129 = pneg %p123
      %p130 = scmp.eq.s32.totalorder %s20, 1
      %p131 = por %p129, %p130
      %p132 = scmp.ne.s32.totalorder %s124, %s127
      %p133 = scmp.eq.s32.totalorder %s20, 0
      %p134 = por %p132, %p133
      %p135 = scmp.ne.s32.totalorder %s124, %s127
      %p136 = scmp.eq.s32.totalorder %s25, 1
      %p137 = por %p135, %p136
      %p138 = scmp.ne.s32.totalorder %s127, %s128
      %p139 = scmp.eq.s32.totalorder %s25, 0
      %p140 = por %p138, %p139
      %p141 = scmp.ne.s32.totalorder %s127, %s128
      %p142 = scmp.eq.s32.totalorder %s26, 1
      %p143 = por %p141, %p142
      %p145 = scmp.ne.s32.totalorder %s128, %s144
      %p146 = scmp.eq.s32.totalorder %s26, 0
      %p147 = por %p145, %p146
      %s148 = ssub.s32 %s20, %s27
      %p149 = scmp.eq.s32.totalorder %s148, 0
      %s151 = sadd.s32 %s150, 1
      %s152 = scalar_select %p149, %s150, %s151
      %p155 = pneg %p149
      %p156 = scmp.eq.s32.totalorder %s20, 1
      %p157 = por %p155, %p156
      %p158 = scmp.ne.s32.totalorder %s150, %s153
      %p159 = scmp.eq.s32.totalorder %s20, 0
      %p160 = por %p158, %p159
      %p161 = scmp.ne.s32.totalorder %s150, %s153
      %p162 = scmp.eq.s32.totalorder %s25, 1
      %p163 = por %p161, %p162
      %p164 = scmp.ne.s32.totalorder %s153, %s154
      %p165 = scmp.eq.s32.totalorder %s25, 0
      %p166 = por %p164, %p165
      %p167 = scmp.ne.s32.totalorder %s153, %s154
      %p168 = scmp.eq.s32.totalorder %s26, 1
      %p169 = por %p167, %p168
      %p171 = scmp.ne.s32.totalorder %s154, %s170
      %p172 = scmp.eq.s32.totalorder %s26, 0
      %p173 = por %p171, %p172
      %s174 = ssub.s32 %s20, %s27
      %p175 = scmp.eq.s32.totalorder %s174, 0
      %s177 = sadd.s32 %s176, 1
      %s178 = scalar_select %p175, %s176, %s177
      %p181 = pneg %p175
      %p182 = scmp.eq.s32.totalorder %s20, 1
      %p183 = por %p181, %p182
      %p184 = scmp.ne.s32.totalorder %s176, %s179
      %p185 = scmp.eq.s32.totalorder %s20, 0
      %p186 = por %p184, %p185
      %p187 = scmp.ne.s32.totalorder %s176, %s179
      %p188 = scmp.eq.s32.totalorder %s25, 1
      %p189 = por %p187, %p188
      %p190 = scmp.ne.s32.totalorder %s179, %s180
      %p191 = scmp.eq.s32.totalorder %s25, 0
      %p192 = por %p190, %p191
      %p193 = scmp.ne.s32.totalorder %s179, %s180
      %p194 = scmp.eq.s32.totalorder %s26, 1
      %p195 = por %p193, %p194
      %p197 = scmp.ne.s32.totalorder %s180, %s196
      %p198 = scmp.eq.s32.totalorder %s26, 0
      %p199 = por %p197, %p198
      %p200 = scmp.le.s32.totalorder 1, %s20
      %p201 = scmp.lt.s32.totalorder %s20, 3
      %p202 = pnand %p200, %p201
      %p203 = pneg %p202
      // Predicated region
      $region9: #{encoder_text_forward.3} parent=5 // pred_check
        _
      $region10: #{encoder_text_forward.3} parent=5 // pred_check_branch
        %205 = sbr.rel (%p202) target = $region12
      $region11: #{encoder_text_forward.3} parent=5 // pred_region
        %s206 = ssub.s32 %s20, 1
        // Predicated region
        $region13: #{encoder_text_forward.3} parent=11 // pred_check
          %p207 = pneg %p41
        $region14: #{encoder_text_forward.3} parent=11 // pred_check_branch
          %209 = sbr.rel (%p207) target = $region16
        $region15: #{encoder_text_forward.3} parent=11 // pred_region
          _
        $region16: #{encoder_text_forward.3} parent=11 // pred_fallthru
          _
        // Predicated region
        $region17: #{encoder_text_forward.3} parent=11 // pred_check
          %p210 = pneg %p62
        $region18: #{encoder_text_forward.3} parent=11 // pred_check_branch
          %212 = sbr.rel (%p210) target = $region20
        $region19: #{encoder_text_forward.3} parent=11 // pred_region
          _
        $region20: #{encoder_text_forward.3} parent=11 // pred_fallthru
          _
      $region12: #{encoder_text_forward.3} parent=5 // pred_fallthru
        _
      %p213 = scmp.lt.s32.totalorder %s20, 2
      // Predicated region
      $region21: #{encoder_text_forward.3} parent=5 // pred_check
        %p214 = pneg %p213
      $region22: #{encoder_text_forward.3} parent=5 // pred_check_branch
        %216 = sbr.rel (%p214) target = $region24
      $region23: #{encoder_text_forward.3} parent=5 // pred_region
        // Predicated region
        $region25: #{encoder_text_forward.3} parent=23 // pred_check
          %p217 = pneg %p82
        $region26: #{encoder_text_forward.3} parent=23 // pred_check_branch
          %219 = sbr.rel (%p217) target = $region28
        $region27: #{encoder_text_forward.3} parent=23 // pred_region
          %s220 = sand.u32 %s72, 1
          %s221 = scalar_lea.sflag [#allocation7], %s220
          %s222 = sand.u32 %s72, 1
          %s223 = smul.addr %s222, 384
          %s224 = scalar_lea.vmem [#allocation6], %s223
          %226 = vsyncadd %s221, 0
          %s227 = smul.addr %s20, 48
          %s228 = smul.addr %s227, 8
          %s229 = scalar_lea.hbm %s3, %s228
          %s230 = sshll.u32 %s229, 4
          %s231 = int_to_ptr.hbm [resolvable:$true] %s230
          %s232 = sshll.u32 %s224, 4
          %s233 = int_to_ptr.vmem [resolvable:$true] %s232
          %238 = dma.hbm_to_vmem [thread:$0]  %s231, 6144, %s233, %s221, 384, 384, 24
        $region28: #{encoder_text_forward.3} parent=23 // pred_fallthru
          _
        // Predicated region
        $region29: #{encoder_text_forward.3} parent=23 // pred_check
          %p239 = pneg %p108
        $region30: #{encoder_text_forward.3} parent=23 // pred_check_branch
          %241 = sbr.rel (%p239) target = $region32
        $region31: #{encoder_text_forward.3} parent=23 // pred_region
          %s242 = sand.u32 %s98, 1
          %s243 = scalar_lea.sflag [#allocation9], %s242
          %s244 = sand.u32 %s98, 1
          %s245 = smul.addr %s244, 384
          %s246 = scalar_lea.vmem [#allocation8], %s245
          %248 = vsyncadd %s243, 0
          %s249 = smul.addr %s20, 48
          %s250 = smul.addr %s249, 8
          %s251 = scalar_lea.hbm %s4, %s250
          %s252 = sshll.u32 %s251, 4
          %s253 = int_to_ptr.hbm [resolvable:$true] %s252
          %s254 = sshll.u32 %s246, 4
          %s255 = int_to_ptr.vmem [resolvable:$true] %s254
          %260 = dma.hbm_to_vmem [thread:$0]  %s253, 6144, %s255, %s243, 384, 384, 24
        $region32: #{encoder_text_forward.3} parent=23 // pred_fallthru
          _
        // Predicated region
        $region33: #{encoder_text_forward.3} parent=23 // pred_check
          %p261 = pneg %p134
        $region34: #{encoder_text_forward.3} parent=23 // pred_check_branch
          %263 = sbr.rel (%p261) target = $region36
        $region35: #{encoder_text_forward.3} parent=23 // pred_region
          %p264 = scmp.lt.s32.totalorder %s20, 1
          %s265 = scalar_select %p264, %s20, 1
          %s266 = smul.addr %s265, 3
          %s267 = scalar_lea.vmem %s5, %s266
        $region36: #{encoder_text_forward.3} parent=23 // pred_fallthru
          _
        // Predicated region
        $region37: #{encoder_text_forward.3} parent=23 // pred_check
          %p268 = pneg %p160
        $region38: #{encoder_text_forward.3} parent=23 // pred_check_branch
          %270 = sbr.rel (%p268) target = $region40
        $region39: #{encoder_text_forward.3} parent=23 // pred_region
          %p271 = scmp.lt.s32.totalorder %s20, 1
          %s272 = scalar_select %p271, %s20, 1
          %s273 = scalar_lea.vmem %s6, %s272
        $region40: #{encoder_text_forward.3} parent=23 // pred_fallthru
          _
      $region24: #{encoder_text_forward.3} parent=5 // pred_fallthru
        _
      %p274 = scmp.le.s32.totalorder 1, %s20
      %p275 = scmp.lt.s32.totalorder %s20, 3
      %p276 = pnand %p274, %p275
      %p277 = pneg %p276
      // Predicated region
      $region41: #{encoder_text_forward.3} parent=5 // pred_check
        _
      $region42: #{encoder_text_forward.3} parent=5 // pred_check_branch
        %279 = sbr.rel (%p276) target = $region44
      $region43: #{encoder_text_forward.3} parent=5 // pred_region
        %s280 = ssub.s32 %s20, 1
        %s281 = sand.u32 %s75, 1
        %s282 = scalar_lea.sflag [#allocation7], %s281
        %s283 = sand.u32 %s75, 1
        %s284 = smul.addr %s283, 384
        %s285 = scalar_lea.vmem [#allocation6], %s284
        // Predicated region
        $region45: #{encoder_text_forward.3} parent=43 // pred_check
          %p286 = pneg %p88
        $region46: #{encoder_text_forward.3} parent=43 // pred_check_branch
          %288 = sbr.rel (%p286) target = $region48
        $region47: #{encoder_text_forward.3} parent=43 // pred_region
          %290 = dma.done %s282, 6144
        $region48: #{encoder_text_forward.3} parent=43 // pred_fallthru
          _
        %s291 = sand.u32 %s101, 1
        %s292 = scalar_lea.sflag [#allocation9], %s291
        %s293 = sand.u32 %s101, 1
        %s294 = smul.addr %s293, 384
        %s295 = scalar_lea.vmem [#allocation8], %s294
        // Predicated region
        $region49: #{encoder_text_forward.3} parent=43 // pred_check
          %p296 = pneg %p114
        $region50: #{encoder_text_forward.3} parent=43 // pred_check_branch
          %298 = sbr.rel (%p296) target = $region52
        $region51: #{encoder_text_forward.3} parent=43 // pred_region
          %300 = dma.done %s292, 6144
        $region52: #{encoder_text_forward.3} parent=43 // pred_fallthru
          _
        %p301 = pneg %p41
        %p302 = pneg %p38
        %p303 = pneg %p62
        %p304 = pneg %p59
        %s305 = sand.u32 %s75, 1
        %s306 = scalar_lea.sflag [#allocation7], %s305
        %s307 = sand.u32 %s75, 1
        %s308 = smul.addr %s307, 384
        %s309 = scalar_lea.vmem [#allocation6], %s308
        %p310 = pneg %p88
        %p311 = pneg %p85
        %s312 = sand.u32 %s101, 1
        %s313 = scalar_lea.sflag [#allocation9], %s312
        %s314 = sand.u32 %s101, 1
        %s315 = smul.addr %s314, 384
        %s316 = scalar_lea.vmem [#allocation8], %s315
        %p317 = pneg %p114
        %p318 = pneg %p111
        %p319 = scmp.lt.s32.totalorder %s25, 1
        %s320 = scalar_select %p319, %s25, 1
        %s321 = smul.addr %s320, 3
        %s322 = scalar_lea.vmem %s5, %s321
        %p323 = pneg %p140
        %p324 = pneg %p137
        %p325 = scmp.lt.s32.totalorder %s25, 1
        %s326 = scalar_select %p325, %s25, 1
        %s327 = scalar_lea.vmem %s6, %s326
        %p328 = pneg %p166
        %p329 = pneg %p163
        %p330 = pneg %p192
        %p331 = pneg %p189
        %s332 = sand.u32 %s179, 1
        %s333 = sand.u32 %s179, 1
        %s334 = smul.addr %s333, 64
        %s335 = scalar_lea.vmem [#allocation10], %s334
        %p336 = scmp.lt.s32.totalorder %s25, 1
        %s337 = scalar_select %p336, %s25, 1
        %s338 = smul.addr %s337, 3
        %s339 = scalar_lea.vmem %s5, %s338
        %p340 = scmp.lt.s32.totalorder %s25, 1
        %s341 = scalar_select %p340, %s25, 1
        %s342 = scalar_lea.vmem %s6, %s341
        %s343 = sld [smem:[#allocation5]]
        %v344 = vld [vmem:[%s1] sm:$0xff]
        %v345 = vld [vmem:[%s1 + $0x8] sm:$0xff]
        %v346 = vld [vmem:[%s1 + $0x10] sm:$0xff]
        %v347 = vld [vmem:[%s1 + $0x18] sm:$0xff]
        %v348 = vld [vmem:[%s1 + $0x20] sm:$0xff]
        %v349 = vld [vmem:[%s1 + $0x28] sm:$0xff]
        %v350 = vld [vmem:[%s1 + $0x30] sm:$0xff]
        %v351 = vld [vmem:[%s1 + $0x38] sm:$0xff]
        %v352 = vld [vmem:[%s285] sm:$0xff]
        %v353 = vld [vmem:[%s285 + $0x8] sm:$0xff]
        %v354 = vld [vmem:[%s285 + $0x10] sm:$0xff]
        %v355 = vld [vmem:[%s285 + $0x18] sm:$0xff]
        %v356 = vld [vmem:[%s285 + $0x20] sm:$0xff]
        %v357 = vld [vmem:[%s285 + $0x28] sm:$0xff]
        %v358 = vld [vmem:[%s285 + $0x30] sm:$0xff]
        %v359 = vld [vmem:[%s285 + $0x38] sm:$0xff]
        %v360 = vld [vmem:[%s285 + $0x40] sm:$0xff]
        %v361 = vld [vmem:[%s285 + $0x48] sm:$0xff]
        %v362 = vld [vmem:[%s285 + $0x50] sm:$0xff]
        %v363 = vld [vmem:[%s285 + $0x58] sm:$0xff]
        %v364 = vld [vmem:[%s285 + $0x60] sm:$0xff]
        %v365 = vld [vmem:[%s285 + $0x68] sm:$0xff]
        %v366 = vld [vmem:[%s285 + $0x70] sm:$0xff]
        %v367 = vld [vmem:[%s285 + $0x78] sm:$0xff]
        %v368 = vld [vmem:[%s285 + $0x80] sm:$0xff]
        %v369 = vld [vmem:[%s285 + $0x88] sm:$0xff]
        %v370 = vld [vmem:[%s285 + $0x90] sm:$0xff]
        %v371 = vld [vmem:[%s285 + $0x98] sm:$0xff]
        %v372 = vld [vmem:[%s285 + $0xa0] sm:$0xff]
        %v373 = vld [vmem:[%s285 + $0xa8] sm:$0xff]
        %v374 = vld [vmem:[%s285 + $0xb0] sm:$0xff]
        %v375 = vld [vmem:[%s285 + $0xb8] sm:$0xff]
        %v376 = vld [vmem:[%s285 + $0xc0] sm:$0xff]
        %v377 = vld [vmem:[%s285 + $0xc8] sm:$0xff]
        %v378 = vld [vmem:[%s285 + $0xd0] sm:$0xff]
        %v379 = vld [vmem:[%s285 + $0xd8] sm:$0xff]
        %v380 = vld [vmem:[%s285 + $0xe0] sm:$0xff]
        %v381 = vld [vmem:[%s285 + $0xe8] sm:$0xff]
        %v382 = vld [vmem:[%s285 + $0xf0] sm:$0xff]
        %v383 = vld [vmem:[%s285 + $0xf8] sm:$0xff]
        %v384 = vld [vmem:[%s285 + $0x100] sm:$0xff]
        %v385 = vld [vmem:[%s285 + $0x108] sm:$0xff]
        %v386 = vld [vmem:[%s285 + $0x110] sm:$0xff]
        %v387 = vld [vmem:[%s285 + $0x118] sm:$0xff]
        %v388 = vld [vmem:[%s285 + $0x120] sm:$0xff]
        %v389 = vld [vmem:[%s285 + $0x128] sm:$0xff]
        %v390 = vld [vmem:[%s285 + $0x130] sm:$0xff]
        %v391 = vld [vmem:[%s285 + $0x138] sm:$0xff]
        %v392 = vld [vmem:[%s285 + $0x140] sm:$0xff]
        %v393 = vld [vmem:[%s285 + $0x148] sm:$0xff]
        %v394 = vld [vmem:[%s285 + $0x150] sm:$0xff]
        %v395 = vld [vmem:[%s285 + $0x158] sm:$0xff]
        %v396 = vld [vmem:[%s285 + $0x160] sm:$0xff]
        %v397 = vld [vmem:[%s285 + $0x168] sm:$0xff]
        %v398 = vld [vmem:[%s285 + $0x170] sm:$0xff]
        %v399 = vld [vmem:[%s285 + $0x178] sm:$0xff]
        %v400 = vld [vmem:[%s339] sm:$0x7]
        %v402 = vperm.slane %v400, 0
        %v403 = vperm.slane %v400, 1
        %v404 = vperm.slane %v400, 2
        %408 = vmatpush.msra.mxu0 %v397
        %409 = vmatpush.msra.mxu0 %v394
        %410 = vmatpush.msra.mxu0 %v391
        %411 = vmatpush.msra.mxu0 %v388
        %412 = vmatpush.msra.mxu0 %v385
        %413 = vmatpush.msra.mxu0 %v382
        %414 = vmatpush.msra.mxu0 %v379
        %415 = vmatpush.msra.mxu0 %v376
        %416 = vmatpush.msra.mxu0 %v373
        %417 = vmatpush.msra.mxu0 %v370
        %418 = vmatpush.msra.mxu0 %v367
        %419 = vmatpush.msra.mxu0 %v364
        %420 = vmatpush.msra.mxu0 %v361
        %421 = vmatpush.msra.mxu0 %v358
        %422 = vmatpush.msra.mxu0 %v355
        %423 = vmatpush.msra.mxu0 %v352
        %424 = vmatmul.f32.gmra.mxu0 %v344
        %v425 = vpop.f32.mrf.mxu0
        %v426 = vadd.f32 %v402, %v425
        %427 = vmatmul.f32.gmra.mxu0 %v345
        %v428 = vpop.f32.mrf.mxu0
        %v429 = vadd.f32 %v402, %v428
        %430 = vmatmul.f32.gmra.mxu0 %v346
        %v431 = vpop.f32.mrf.mxu0
        %v432 = vadd.f32 %v402, %v431
        %433 = vmatmul.f32.gmra.mxu0 %v347
        %v434 = vpop.f32.mrf.mxu0
        %v435 = vadd.f32 %v402, %v434
        %436 = vmatmul.f32.gmra.mxu0 %v348
        %v437 = vpop.f32.mrf.mxu0
        %v438 = vadd.f32 %v402, %v437
        %439 = vmatmul.f32.gmra.mxu0 %v349
        %v440 = vpop.f32.mrf.mxu0
        %v441 = vadd.f32 %v402, %v440
        %442 = vmatmul.f32.gmra.mxu0 %v350
        %v443 = vpop.f32.mrf.mxu0
        %v444 = vadd.f32 %v402, %v443
        %445 = vmatmul.f32.gmra.mxu0 %v351
        %v446 = vpop.f32.mrf.mxu0
        %v447 = vadd.f32 %v402, %v446
        %448 = vdwg.mxu0
        %449 = vmatpush.msra.mxu0 %v398
        %450 = vmatpush.msra.mxu0 %v395
        %451 = vmatpush.msra.mxu0 %v392
        %452 = vmatpush.msra.mxu0 %v389
        %453 = vmatpush.msra.mxu0 %v386
        %454 = vmatpush.msra.mxu0 %v383
        %455 = vmatpush.msra.mxu0 %v380
        %456 = vmatpush.msra.mxu0 %v377
        %457 = vmatpush.msra.mxu0 %v374
        %458 = vmatpush.msra.mxu0 %v371
        %459 = vmatpush.msra.mxu0 %v368
        %460 = vmatpush.msra.mxu0 %v365
        %461 = vmatpush.msra.mxu0 %v362
        %462 = vmatpush.msra.mxu0 %v359
        %463 = vmatpush.msra.mxu0 %v356
        %464 = vmatpush.msra.mxu0 %v353
        %465 = vmatmul.f32.gmra.mxu0 %v344
        %v466 = vpop.f32.mrf.mxu0
        %v467 = vadd.f32 %v403, %v466
        %468 = vmatmul.f32.gmra.mxu0 %v345
        %v469 = vpop.f32.mrf.mxu0
        %v470 = vadd.f32 %v403, %v469
        %471 = vmatmul.f32.gmra.mxu0 %v346
        %v472 = vpop.f32.mrf.mxu0
        %v473 = vadd.f32 %v403, %v472
        %474 = vmatmul.f32.gmra.mxu0 %v347
        %v475 = vpop.f32.mrf.mxu0
        %v476 = vadd.f32 %v403, %v475
        %477 = vmatmul.f32.gmra.mxu0 %v348
        %v478 = vpop.f32.mrf.mxu0
        %v479 = vadd.f32 %v403, %v478
        %480 = vmatmul.f32.gmra.mxu0 %v349
        %v481 = vpop.f32.mrf.mxu0
        %v482 = vadd.f32 %v403, %v481
        %483 = vmatmul.f32.gmra.mxu0 %v350
        %v484 = vpop.f32.mrf.mxu0
        %v485 = vadd.f32 %v403, %v484
        %486 = vmatmul.f32.gmra.mxu0 %v351
        %v487 = vpop.f32.mrf.mxu0
        %v488 = vadd.f32 %v403, %v487
        %489 = vdwg.mxu0
        %490 = vmatpush.msra.mxu0 %v399
        %491 = vmatpush.msra.mxu0 %v396
        %492 = vmatpush.msra.mxu0 %v393
        %493 = vmatpush.msra.mxu0 %v390
        %494 = vmatpush.msra.mxu0 %v387
        %495 = vmatpush.msra.mxu0 %v384
        %496 = vmatpush.msra.mxu0 %v381
        %497 = vmatpush.msra.mxu0 %v378
        %498 = vmatpush.msra.mxu0 %v375
        %499 = vmatpush.msra.mxu0 %v372
        %500 = vmatpush.msra.mxu0 %v369
        %501 = vmatpush.msra.mxu0 %v366
        %502 = vmatpush.msra.mxu0 %v363
        %503 = vmatpush.msra.mxu0 %v360
        %504 = vmatpush.msra.mxu0 %v357
        %505 = vmatpush.msra.mxu0 %v354
        %506 = vmatmul.f32.gmra.mxu0 %v344
        %v507 = vpop.f32.mrf.mxu0
        %v508 = vadd.f32 %v404, %v507
        %509 = vmatmul.f32.gmra.mxu0 %v345
        %v510 = vpop.f32.mrf.mxu0
        %v511 = vadd.f32 %v404, %v510
        %512 = vmatmul.f32.gmra.mxu0 %v346
        %v513 = vpop.f32.mrf.mxu0
        %v514 = vadd.f32 %v404, %v513
        %515 = vmatmul.f32.gmra.mxu0 %v347
        %v516 = vpop.f32.mrf.mxu0
        %v517 = vadd.f32 %v404, %v516
        %518 = vmatmul.f32.gmra.mxu0 %v348
        %v519 = vpop.f32.mrf.mxu0
        %v520 = vadd.f32 %v404, %v519
        %521 = vmatmul.f32.gmra.mxu0 %v349
        %v522 = vpop.f32.mrf.mxu0
        %v523 = vadd.f32 %v404, %v522
        %524 = vmatmul.f32.gmra.mxu0 %v350
        %v525 = vpop.f32.mrf.mxu0
        %v526 = vadd.f32 %v404, %v525
        %527 = vmatmul.f32.gmra.mxu0 %v351
        %v528 = vpop.f32.mrf.mxu0
        %v529 = vadd.f32 %v404, %v528
        %530 = vdwg.mxu0
        %531 = vst [vmem:[#allocation2] sm:$0xff] %v426
        %532 = vst [vmem:[#allocation2 + $0x8] sm:$0xff] %v467
        %533 = vst [vmem:[#allocation2 + $0x10] sm:$0xff] %v508
        %534 = vst [vmem:[#allocation2 + $0x18] sm:$0xff] %v429
        %535 = vst [vmem:[#allocation2 + $0x20] sm:$0xff] %v470
        %536 = vst [vmem:[#allocation2 + $0x28] sm:$0xff] %v511
        %537 = vst [vmem:[#allocation2 + $0x30] sm:$0xff] %v432
        %538 = vst [vmem:[#allocation2 + $0x38] sm:$0xff] %v473
        %539 = vst [vmem:[#allocation2 + $0x40] sm:$0xff] %v514
        %540 = vst [vmem:[#allocation2 + $0x48] sm:$0xff] %v435
        %541 = vst [vmem:[#allocation2 + $0x50] sm:$0xff] %v476
        %542 = vst [vmem:[#allocation2 + $0x58] sm:$0xff] %v517
        %543 = vst [vmem:[#allocation2 + $0x60] sm:$0xff] %v438
        %544 = vst [vmem:[#allocation2 + $0x68] sm:$0xff] %v479
        %545 = vst [vmem:[#allocation2 + $0x70] sm:$0xff] %v520
        %546 = vst [vmem:[#allocation2 + $0x78] sm:$0xff] %v441
        %547 = vst [vmem:[#allocation2 + $0x80] sm:$0xff] %v482
        %548 = vst [vmem:[#allocation2 + $0x88] sm:$0xff] %v523
        %549 = vst [vmem:[#allocation2 + $0x90] sm:$0xff] %v444
        %550 = vst [vmem:[#allocation2 + $0x98] sm:$0xff] %v485
        %551 = vst [vmem:[#allocation2 + $0xa0] sm:$0xff] %v526
        %552 = vst [vmem:[#allocation2 + $0xa8] sm:$0xff] %v447
        %553 = vst [vmem:[#allocation2 + $0xb0] sm:$0xff] %v488
        %554 = vst [vmem:[#allocation2 + $0xb8] sm:$0xff] %v529
        %555 = vst [vmem:[#allocation3] sm:$0xff] 0.0
        %p556 = scmp.lt.s32.totalorder %s343, 8
        // Predicated region
        $region53: #{encoder_text_forward.3} parent=43 // pred_check
          %p557 = pneg %p556
        $region54: #{encoder_text_forward.3} parent=43 // pred_check_branch
          %559 = sbr.rel (%p557) target = $region56
        $region55: #{encoder_text_forward.3} parent=43 // pred_region
          %560 = vst [vmem:[%s335] sm:$0xff] 0.0
          %561 = vst [vmem:[%s335 + $0x8] sm:$0xff] 0.0
          %562 = vst [vmem:[%s335 + $0x10] sm:$0xff] 0.0
          %563 = vst [vmem:[%s335 + $0x18] sm:$0xff] 0.0
          %564 = vst [vmem:[%s335 + $0x20] sm:$0xff] 0.0
          %565 = vst [vmem:[%s335 + $0x28] sm:$0xff] 0.0
          %566 = vst [vmem:[%s335 + $0x30] sm:$0xff] 0.0
          %567 = vst [vmem:[%s335 + $0x38] sm:$0xff] 0.0
        $region56: #{encoder_text_forward.3} parent=43 // pred_fallthru
          _
        %v568 = vld [vmem:[%s2] sm:$0xff]
        %v569 = vld [vmem:[%s342] sm:$0x1]
        %v571 = vperm.slane %v569, 0
        // While loop
        $region57: #{encoder_text_forward.3} parent=43 // loop_pre_header
          _
        $region58: #{encoder_text_forward.3} parent=43 // loop_header
          %s574 = sphi 0, %s576
          %p575 = scmp.ge.s32.totalorder %s574, %s343
        $region59: #{encoder_text_forward.3} parent=43 // loop_header_branch
          %578 = sbr.rel (%p575) target = $region63
        $region60: #{encoder_text_forward.3} parent=43 // loop_body
          %p579 = scmp.eq.s32.totalorder %s25, 0
          %s580 = ssub.s32 %s343, 1
          %s581 = ssub.s32 %s580, %s574
          %s582 = scalar_select %p579, %s574, %s581
          %s583 = smul.u32 %s582, 8
          %s584 = sshra.s32 %s583, 3
          %s585 = sand.u32 %s583, 7
          %s586 = smul.u32 %s584, 3
          %s587 = smul.addr %s586, 8
          %s588 = scalar_lea.vmem [#allocation2], %s587
          %v589 = vld [vmem:[%s588] sm:$0xff]
          %v590 = vld [vmem:[%s588 + $0x8] sm:$0xff]
          %v591 = vld [vmem:[%s588 + $0x10] sm:$0xff]
          %v592 = vld [vmem:[#allocation3] sm:$0xff]
          %v593 = vld [vmem:[%s295] sm:$0xff]
          %v594 = vld [vmem:[%s295 + $0x8] sm:$0xff]
          %v595 = vld [vmem:[%s295 + $0x10] sm:$0xff]
          %v596 = vld [vmem:[%s295 + $0x18] sm:$0xff]
          %v597 = vld [vmem:[%s295 + $0x20] sm:$0xff]
          %v598 = vld [vmem:[%s295 + $0x28] sm:$0xff]
          %v599 = vld [vmem:[%s295 + $0x30] sm:$0xff]
          %v600 = vld [vmem:[%s295 + $0x38] sm:$0xff]
          %v601 = vld [vmem:[%s295 + $0x40] sm:$0xff]
          %v602 = vld [vmem:[%s295 + $0x48] sm:$0xff]
          %v603 = vld [vmem:[%s295 + $0x50] sm:$0xff]
          %v604 = vld [vmem:[%s295 + $0x58] sm:$0xff]
          %v605 = vld [vmem:[%s295 + $0x60] sm:$0xff]
          %v606 = vld [vmem:[%s295 + $0x68] sm:$0xff]
          %v607 = vld [vmem:[%s295 + $0x70] sm:$0xff]
          %v608 = vld [vmem:[%s295 + $0x78] sm:$0xff]
          %v609 = vld [vmem:[%s295 + $0x80] sm:$0xff]
          %v610 = vld [vmem:[%s295 + $0x88] sm:$0xff]
          %v611 = vld [vmem:[%s295 + $0x90] sm:$0xff]
          %v612 = vld [vmem:[%s295 + $0x98] sm:$0xff]
          %v613 = vld [vmem:[%s295 + $0xa0] sm:$0xff]
          %v614 = vld [vmem:[%s295 + $0xa8] sm:$0xff]
          %v615 = vld [vmem:[%s295 + $0xb0] sm:$0xff]
          %v616 = vld [vmem:[%s295 + $0xb8] sm:$0xff]
          %v617 = vld [vmem:[%s295 + $0xc0] sm:$0xff]
          %v618 = vld [vmem:[%s295 + $0xc8] sm:$0xff]
          %v619 = vld [vmem:[%s295 + $0xd0] sm:$0xff]
          %v620 = vld [vmem:[%s295 + $0xd8] sm:$0xff]
          %v621 = vld [vmem:[%s295 + $0xe0] sm:$0xff]
          %v622 = vld [vmem:[%s295 + $0xe8] sm:$0xff]
          %v623 = vld [vmem:[%s295 + $0xf0] sm:$0xff]
          %v624 = vld [vmem:[%s295 + $0xf8] sm:$0xff]
          %v625 = vld [vmem:[%s295 + $0x100] sm:$0xff]
          %v626 = vld [vmem:[%s295 + $0x108] sm:$0xff]
          %v627 = vld [vmem:[%s295 + $0x110] sm:$0xff]
          %v628 = vld [vmem:[%s295 + $0x118] sm:$0xff]
          %v629 = vld [vmem:[%s295 + $0x120] sm:$0xff]
          %v630 = vld [vmem:[%s295 + $0x128] sm:$0xff]
          %v631 = vld [vmem:[%s295 + $0x130] sm:$0xff]
          %v632 = vld [vmem:[%s295 + $0x138] sm:$0xff]
          %v633 = vld [vmem:[%s295 + $0x140] sm:$0xff]
          %v634 = vld [vmem:[%s295 + $0x148] sm:$0xff]
          %v635 = vld [vmem:[%s295 + $0x150] sm:$0xff]
          %v636 = vld [vmem:[%s295 + $0x158] sm:$0xff]
          %v637 = vld [vmem:[%s295 + $0x160] sm:$0xff]
          %v638 = vld [vmem:[%s295 + $0x168] sm:$0xff]
          %v639 = vld [vmem:[%s295 + $0x170] sm:$0xff]
          %v640 = vld [vmem:[%s295 + $0x178] sm:$0xff]
          %641 = vmatpush.msra.mxu0 %v638
          %642 = vmatpush.msra.mxu0 %v635
          %643 = vmatpush.msra.mxu0 %v632
          %644 = vmatpush.msra.mxu0 %v629
          %645 = vmatpush.msra.mxu0 %v626
          %646 = vmatpush.msra.mxu0 %v623
          %647 = vmatpush.msra.mxu0 %v620
          %648 = vmatpush.msra.mxu0 %v617
          %649 = vmatpush.msra.mxu0 %v614
          %650 = vmatpush.msra.mxu0 %v611
          %651 = vmatpush.msra.mxu0 %v608
          %652 = vmatpush.msra.mxu0 %v605
          %653 = vmatpush.msra.mxu0 %v602
          %654 = vmatpush.msra.mxu0 %v599
          %655 = vmatpush.msra.mxu0 %v596
          %656 = vmatpush.msra.mxu0 %v593
          %657 = vmatmul.f32.gmra.mxu0 %v592
          %v658 = vpop.f32.mrf.mxu0
          %v659 = vadd.f32 0.0, %v658
          %660 = vdwg.mxu0
          %661 = vmatpush.msra.mxu0 %v639
          %662 = vmatpush.msra.mxu0 %v636
          %663 = vmatpush.msra.mxu0 %v633
          %664 = vmatpush.msra.mxu0 %v630
          %665 = vmatpush.msra.mxu0 %v627
          %666 = vmatpush.msra.mxu0 %v624
          %667 = vmatpush.msra.mxu0 %v621
          %668 = vmatpush.msra.mxu0 %v618
          %669 = vmatpush.msra.mxu0 %v615
          %670 = vmatpush.msra.mxu0 %v612
          %671 = vmatpush.msra.mxu0 %v609
          %672 = vmatpush.msra.mxu0 %v606
          %673 = vmatpush.msra.mxu0 %v603
          %674 = vmatpush.msra.mxu0 %v600
          %675 = vmatpush.msra.mxu0 %v597
          %676 = vmatpush.msra.mxu0 %v594
          %677 = vmatmul.f32.gmra.mxu0 %v592
          %v678 = vpop.f32.mrf.mxu0
          %v679 = vadd.f32 0.0, %v678
          %680 = vdwg.mxu0
          %681 = vmatpush.msra.mxu0 %v640
          %682 = vmatpush.msra.mxu0 %v637
          %683 = vmatpush.msra.mxu0 %v634
          %684 = vmatpush.msra.mxu0 %v631
          %685 = vmatpush.msra.mxu0 %v628
          %686 = vmatpush.msra.mxu0 %v625
          %687 = vmatpush.msra.mxu0 %v622
          %688 = vmatpush.msra.mxu0 %v619
          %689 = vmatpush.msra.mxu0 %v616
          %690 = vmatpush.msra.mxu0 %v613
          %691 = vmatpush.msra.mxu0 %v610
          %692 = vmatpush.msra.mxu0 %v607
          %693 = vmatpush.msra.mxu0 %v604
          %694 = vmatpush.msra.mxu0 %v601
          %695 = vmatpush.msra.mxu0 %v598
          %696 = vmatpush.msra.mxu0 %v595
          %697 = vmatmul.f32.gmra.mxu0 %v592
          %v698 = vpop.f32.mrf.mxu0
          %v699 = vadd.f32 0.0, %v698
          %700 = vdwg.mxu0
          %v701 = vadd.f32 %v589, %v659
          %v702 = vxor.u32 %v701, 2147483648
          %v703 = vmul.f32 %v702, 1.442695
          %v704 = vpow.pop %v703
          %v705 = vadd.f32 %v704, 1.0
          %v706 = vrcp.pop %v705
          %v707 = vmul.f32 %v705, %v706
          %v708 = vsub.f32 1.0, %v707
          %v709 = vmul.f32 %v706, %v708
          %v710 = vadd.f32 %v706, %v709
          %vm711 = vweird.f32 %v705
          %vm712 = vweird.f32 %v706
          %vm713 = vmor %vm711, %vm712
          %v714 = vsel %vm713, %v706, %v710
          %v715 = vand.u32 2147483647, %v705
          %vm716 = vcmp.eq.f32.partialorder %v715, 8.507059e+37
          %v717 = vand.u32 %v705, 2147483648
          %v718 = vor.u32 1.1754944e-38, %v717
          %v719 = vsel %vm716, %v718, %v714
          %v720 = vmul.f32 1.0, %v719
          %v721 = vadd.f32 %v590, %v679
          %v722 = vxor.u32 %v721, 2147483648
          %v723 = vmul.f32 %v722, 1.442695
          %v724 = vpow.pop %v723
          %v725 = vadd.f32 %v724, 1.0
          %v726 = vrcp.pop %v725
          %v727 = vmul.f32 %v725, %v726
          %v728 = vsub.f32 1.0, %v727
          %v729 = vmul.f32 %v726, %v728
          %v730 = vadd.f32 %v726, %v729
          %vm731 = vweird.f32 %v725
          %vm732 = vweird.f32 %v726
          %vm733 = vmor %vm731, %vm732
          %v734 = vsel %vm733, %v726, %v730
          %v735 = vand.u32 2147483647, %v725
          %vm736 = vcmp.eq.f32.partialorder %v735, 8.507059e+37
          %v737 = vand.u32 %v725, 2147483648
          %v738 = vor.u32 1.1754944e-38, %v737
          %v739 = vsel %vm736, %v738, %v734
          %v740 = vmul.f32 1.0, %v739
          %v741 = vadd.f32 %v699, %v571
          %v742 = vmul.f32 %v720, %v741
          %v743 = vadd.f32 %v591, %v742
          %v744 = vtanh.pop %v743
          %v745 = vsub.f32 1.0, %v740
          %v746 = vmul.f32 %v745, %v744
          %v747 = vmul.f32 %v740, %v592
          %v748 = vadd.f32 %v746, %v747
          %v749 = vstv %s582
          %vm750 = vcmp.lt.s32.totalorder %v749, %v568
          %v751 = vsel %vm750, 1, 0
          %v752 = vcvt.s32.f32 %v751
          %754 = vset.pattern.permute.xlu0 0
          %755 = vperm.xlu0 %754, %v752
          %v756 = vpop.permute.xlu0 %755
          %v758 = vmul.f32 %v756, %v748
          %v759 = vsub.f32 1.0, %v752
          %761 = vset.pattern.permute.xlu0 0
          %762 = vperm.xlu0 %761, %v759
          %v763 = vpop.permute.xlu0 %762
          %v765 = vmul.f32 %v763, %v592
          %v766 = vadd.f32 %v758, %v765
          %767 = vst [vmem:[#allocation3] sm:$0xff] %v766
          %s768 = scalar_lea.vmem %s335, %s583 [#allocation10]
          %769 = vst [vmem:[%s768] sm:$0xff] %v758
        $region61: #{encoder_text_forward.3} parent=43 // loop_footer
          %s576 = sadd.s32 %s574, 1
        $region62: #{encoder_text_forward.3} parent=43 // loop_footer_branch
          %573 = sbr.rel target = $region58
        $region63: #{encoder_text_forward.3} parent=43 // loop_exit
          _
        %s770 = sand.u32 %s179, 1
        %s771 = sand.u32 %s179, 1
        %s772 = smul.addr %s771, 64
        %s773 = scalar_lea.vmem [#allocation10], %s772
        // Predicated region
        $region64: #{encoder_text_forward.3} parent=43 // pred_check
          %p774 = pneg %p189
        $region65: #{encoder_text_forward.3} parent=43 // pred_check_branch
          %776 = sbr.rel (%p774) target = $region67
        $region66: #{encoder_text_forward.3} parent=43 // pred_region
          %s777 = smul.addr %s25, 8
          %s778 = scalar_lea.vmem %s7, %s777
          // Predicated region
          $region68: #{encoder_text_forward.3} parent=66 // pred_check
            _
          $region69: #{encoder_text_forward.3} parent=66 // pred_check_branch
            %780 = sbr.rel (0) target = $region71
          $region70: #{encoder_text_forward.3} parent=66 // pred_region
            // Predicated region
            $region72: #{encoder_text_forward.3} parent=70 // pred_check
              _
            $region73: #{encoder_text_forward.3} parent=70 // pred_check_branch
              %782 = sbr.rel (0) target = $region75
            $region74: #{encoder_text_forward.3} parent=70 // pred_region
              // Predicated region
              $region87: #{encoder_text_forward.3} parent=74 // pred_check
                _
              $region88: #{encoder_text_forward.3} parent=74 // pred_check_branch
                %812 = sbr.rel (0) target = $region90
              $region89: #{encoder_text_forward.3} parent=74 // pred_region
                loop: start=0, step=1, limit=1
                $region91: #{encoder_text_forward.3} parent=89 // loop_pre_header
                  _
                $region92: #{encoder_text_forward.3} parent=89 // loop_header
                  %s814 = sphi 0, %s818
                  %p815 = scmp.ge.s32.totalorder %s814, 1
                  %s819 = sphi %s773, %s773
                  %s820 = sphi %s778, %s778
                $region93: #{encoder_text_forward.3} parent=89 // loop_header_branch
                  %817 = sbr.rel (%p815) target = $region97
                $region94: #{encoder_text_forward.3} parent=89 // loop_body
                  %v821 = vld [vmem:[%s819] sm:$0xff]
                  %822 = vst [vmem:[%s820] sm:$0xff] %v821
                  %v823 = vld [vmem:[%s819 + $0x8] sm:$0xff]
                  %824 = vst [vmem:[%s820 + $0x10] sm:$0xff] %v823
                  %v825 = vld [vmem:[%s819 + $0x10] sm:$0xff]
                  %826 = vst [vmem:[%s820 + $0x20] sm:$0xff] %v825
                  %v827 = vld [vmem:[%s819 + $0x18] sm:$0xff]
                  %828 = vst [vmem:[%s820 + $0x30] sm:$0xff] %v827
                  %v829 = vld [vmem:[%s819 + $0x20] sm:$0xff]
                  %830 = vst [vmem:[%s820 + $0x40] sm:$0xff] %v829
                  %v831 = vld [vmem:[%s819 + $0x28] sm:$0xff]
                  %832 = vst [vmem:[%s820 + $0x50] sm:$0xff] %v831
                  %v833 = vld [vmem:[%s819 + $0x30] sm:$0xff]
                  %834 = vst [vmem:[%s820 + $0x60] sm:$0xff] %v833
                  %v835 = vld [vmem:[%s819 + $0x38] sm:$0xff]
                  %836 = vst [vmem:[%s820 + $0x70] sm:$0xff] %v835
                $region95: #{encoder_text_forward.3} parent=89 // loop_footer
                  %s818 = sadd.s32 1, %s814
                $region96: #{encoder_text_forward.3} parent=89 // loop_footer_branch
                  %813 = sbr.rel target = $region92
                $region97: #{encoder_text_forward.3} parent=89 // loop_exit
                  _
              $region90: #{encoder_text_forward.3} parent=74 // pred_fallthru
                _
              // Predicated region
              $region98: #{encoder_text_forward.3} parent=74 // pred_check
                _
              $region99: #{encoder_text_forward.3} parent=74 // pred_check_branch
                %838 = sbr.rel target = $region101
              $region100: #{encoder_text_forward.3} parent=74 // pred_region
                _
              $region101: #{encoder_text_forward.3} parent=74 // pred_fallthru
                _
            $region75: #{encoder_text_forward.3} parent=70 // pred_fallthru
              _
            // Predicated region
            $region76: #{encoder_text_forward.3} parent=70 // pred_check
              _
            $region77: #{encoder_text_forward.3} parent=70 // pred_check_branch
              %784 = sbr.rel target = $region79
            $region78: #{encoder_text_forward.3} parent=70 // pred_region
              %s786 = ssub.s32 256, 1
              loop: start=0, step=1, limit=1
              $region80: #{encoder_text_forward.3} parent=78 // loop_pre_header
                _
              $region81: #{encoder_text_forward.3} parent=78 // loop_header
                %s788 = sphi 0, %s792
                %p789 = scmp.ge.s32.totalorder %s788, 1
                %s793 = sphi %s773, %s773
                %s794 = sphi %s778, %s778
              $region82: #{encoder_text_forward.3} parent=78 // loop_header_branch
                %791 = sbr.rel (%p789) target = $region86
              $region83: #{encoder_text_forward.3} parent=78 // loop_body
                %v795 = vld [vmem:[%s793] sm:%s786]
                %796 = vst [vmem:[%s794] sm:%s786] %v795
                %v797 = vld [vmem:[%s793 + $0x8] sm:%s786]
                %798 = vst [vmem:[%s794 + $0x10] sm:%s786] %v797
                %v799 = vld [vmem:[%s793 + $0x10] sm:%s786]
                %800 = vst [vmem:[%s794 + $0x20] sm:%s786] %v799
                %v801 = vld [vmem:[%s793 + $0x18] sm:%s786]
                %802 = vst [vmem:[%s794 + $0x30] sm:%s786] %v801
                %v803 = vld [vmem:[%s793 + $0x20] sm:%s786]
                %804 = vst [vmem:[%s794 + $0x40] sm:%s786] %v803
                %v805 = vld [vmem:[%s793 + $0x28] sm:%s786]
                %806 = vst [vmem:[%s794 + $0x50] sm:%s786] %v805
                %v807 = vld [vmem:[%s793 + $0x30] sm:%s786]
                %808 = vst [vmem:[%s794 + $0x60] sm:%s786] %v807
                %v809 = vld [vmem:[%s793 + $0x38] sm:%s786]
                %810 = vst [vmem:[%s794 + $0x70] sm:%s786] %v809
              $region84: #{encoder_text_forward.3} parent=78 // loop_footer
                %s792 = sadd.s32 1, %s788
              $region85: #{encoder_text_forward.3} parent=78 // loop_footer_branch
                %787 = sbr.rel target = $region81
              $region86: #{encoder_text_forward.3} parent=78 // loop_exit
                _
            $region79: #{encoder_text_forward.3} parent=70 // pred_fallthru
              _
          $region71: #{encoder_text_forward.3} parent=66 // pred_fallthru
            _
          %839 = vnop
        $region67: #{encoder_text_forward.3} parent=43 // pred_fallthru
          _
      $region44: #{encoder_text_forward.3} parent=5 // pred_fallthru
        _
      %p840 = scmp.le.s32.totalorder 2, %s20
      // Predicated region
      $region102: #{encoder_text_forward.3} parent=5 // pred_check
        %p841 = pneg %p840
      $region103: #{encoder_text_forward.3} parent=5 // pred_check_branch
        %843 = sbr.rel (%p841) target = $region105
      $region104: #{encoder_text_forward.3} parent=5 // pred_region
        %s844 = ssub.s32 %s20, 2
        // Predicated region
        $region106: #{encoder_text_forward.3} parent=104 // pred_check
          %p845 = pneg %p195
        $region107: #{encoder_text_forward.3} parent=104 // pred_check_branch
          %847 = sbr.rel (%p845) target = $region109
        $region108: #{encoder_text_forward.3} parent=104 // pred_region
          %s848 = sand.u32 %s180, 1
          %s849 = sand.u32 %s180, 1
          %s850 = smul.addr %s849, 64
          %s851 = scalar_lea.vmem [#allocation10], %s850
        $region109: #{encoder_text_forward.3} parent=104 // pred_fallthru
          _
      $region105: #{encoder_text_forward.3} parent=5 // pred_fallthru
        _
    $region6: #{encoder_text_forward.3} parent=1 // loop_footer
      %s24 = sadd.s32 1, %s20
    $region7: #{encoder_text_forward.3} parent=1 // loop_footer_branch
      %19 = sbr.rel target = $region3
    $region8: #{encoder_text_forward.3} parent=1 // loop_exit
      _
    %852 = vsyncpa [#allocation7], 1
    %s853 = scalar_lea.sflag [#allocation7], 1
    %854 = vsyncpa %s853, 1
    %855 = vsyncpa [#allocation9], 1
    %s856 = scalar_lea.sflag [#allocation9], 1
    %857 = vsyncpa %s856, 1

// kernel: encoder_text_forward.4
$region0: #{encoder_text_forward.4}
  #allocation0 [shape = 'u32[]', space=smem, size = 0x4, offset = 0x4, fixed_abs, tag = 'smem constant byte address 0x4 - core index']
  #allocation1 [shape = 'u32[72,128]{1,0:T(1,128)}', space=vmem, size = 0x9000, scoped, tag = 'internal scratch']
  #allocation2 [shape = 'f32[64,384]{1,0:T(8,128)}', space=vmem, size = 0x18000, scoped, tag = 'scratch operand']
  #allocation3 [shape = 'f32[8,128]{1,0:T(8,128)}', space=vmem, size = 0x1000, scoped, tag = 'scratch operand']
  #allocation4 [shape = 's32[1]{0}', space=sflag, size = 0x4, scoped, tag = 'scoped memory for encoder_text_forward.4']
  #allocation5 [shape = 's32[1]{0:T(128)S(6)}', space=smem, size = 0x200, scoped, tag = 'prefetched SMEM operand 0']
  %s0 = inlined_call_operand.<no memory space> [shape: s32[1], index: 0, kind: input, shape index: {}]
  %s1 = inlined_call_operand.vmem [shape: f32[64,256], index: 1, kind: input, shape index: {}]
  %s2 = inlined_call_operand.vmem [shape: s32[8,1], index: 2, kind: input, shape index: {}]
  %s3 = inlined_call_operand.hbm [shape: f32[2,256,384], index: 3, kind: input, shape index: {}]
  %s4 = inlined_call_operand.hbm [shape: f32[2,128,384], index: 4, kind: input, shape index: {}]
  %s5 = inlined_call_operand.vmem [shape: f32[2,1,384], index: 5, kind: input, shape index: {}]
  %s6 = inlined_call_operand.vmem [shape: f32[2,1,128], index: 6, kind: input, shape index: {}]
  %s7 = inlined_call_operand.vmem [shape: f32[8,8,256], index: 7, kind: output, shape index: {}]
  %s8 = sld [smem:[#allocation0]]
  $region110: #{encoder_text_forward.4} parent=0
    _
  %s10 = ssub.s32 1, %s8
  %s11 = scalar_select 0, %s10, %s8
  %12 = sst [smem:[#allocation5]] %s0
  $region1: #{encoder_text_forward.4} parent=0
    #allocation6 [shape = 'u8[786432]{0}', space=vmem, size = 0xc0000, scoped, tag = 'input window, operand 3']
    #allocation7 [shape = 's32[2]{0}', space=sflag, size = 0x8, scoped, tag = 'scoped memory for encoder_text_forward.4']
    #allocation8 [shape = 'u8[393216]{0}', space=vmem, size = 0x60000, scoped, tag = 'input window, operand 4']
    #allocation9 [shape = 's32[2]{0}', space=sflag, size = 0x8, scoped, tag = 'scoped memory for encoder_text_forward.4']
    #allocation10 [shape = 'u8[65536]{0}', space=vmem, size = 0x10000, scoped, tag = 'output window, operand 0']
    %13 = vsyncpa [#allocation7], 0
    %s14 = scalar_lea.sflag [#allocation7], 1
    %15 = vsyncpa %s14, 0
    %16 = vsyncpa [#allocation9], 0
    %s17 = scalar_lea.sflag [#allocation9], 1
    %18 = vsyncpa %s17, 0
    loop: start=0, step=1, limit=4
    $region2: #{encoder_text_forward.4} parent=1 // loop_pre_header
      _
    $region3: #{encoder_text_forward.4} parent=1 // loop_header
      %s20 = sphi 0, %s24
      %p21 = scmp.ge.s32.totalorder %s20, 4
      %s28 = sphi 0, %s28
      %s30 = sphi 0, %s28
      %s31 = sphi 0, %s30
      %s45 = sphi 0, %s31
      %s49 = sphi 0, %s49
      %s51 = sphi 0, %s49
      %s52 = sphi 0, %s51
      %s66 = sphi 0, %s52
      %s72 = sphi 0, %s74
      %s75 = sphi 0, %s72
      %s76 = sphi 0, %s75
      %s92 = sphi 0, %s76
      %s98 = sphi 0, %s100
      %s101 = sphi 0, %s98
      %s102 = sphi 0, %s101
      %s118 = sphi 0, %s102
      %s124 = sphi 0, %s126
      %s127 = sphi 0, %s124
      %s128 = sphi 0, %s127
      %s144 = sphi 0, %s128
      %s150 = sphi 0, %s152
      %s153 = sphi 0, %s150
      %s154 = sphi 0, %s153
      %s170 = sphi 0, %s154
      %s176 = sphi 0, %s178
      %s179 = sphi 0, %s176
      %s180 = sphi 0, %s179
      %s196 = sphi 0, %s180
    $region4: #{encoder_text_forward.4} parent=1 // loop_header_branch
      %23 = sbr.rel (%p21) target = $region8
    $region5: #{encoder_text_forward.4} parent=1 // loop_body
      %s25 = ssub.s32 %s20, 1
      %s26 = ssub.s32 %s20, 2
      %s27 = sadd.s32 %s20, 1
      %s29 = sadd.s32 %s28, 1
      %p32 = scmp.eq.s32.totalorder %s20, 1
      %p33 = scmp.ne.s32.totalorder %s28, %s30
      %p34 = scmp.eq.s32.totalorder %s20, 0
      %p35 = por %p33, %p34
      %p36 = scmp.ne.s32.totalorder %s28, %s30
      %p37 = scmp.eq.s32.totalorder %s25, 1
      %p38 = por %p36, %p37
      %p39 = scmp.ne.s32.totalorder %s30, %s31
      %p40 = scmp.eq.s32.totalorder %s25, 0
      %p41 = por %p39, %p40
      %p42 = scmp.ne.s32.totalorder %s30, %s31
      %p43 = scmp.eq.s32.totalorder %s26, 1
      %p44 = por %p42, %p43
      %p46 = scmp.ne.s32.totalorder %s31, %s45
      %p47 = scmp.eq.s32.totalorder %s26, 0
      %p48 = por %p46, %p47
      %s50 = sadd.s32 %s49, 1
      %p53 = scmp.eq.s32.totalorder %s20, 1
      %p54 = scmp.ne.s32.totalorder %s49, %s51
      %p55 = scmp.eq.s32.totalorder %s20, 0
      %p56 = por %p54, %p55
      %p57 = scmp.ne.s32.totalorder %s49, %s51
      %p58 = scmp.eq.s32.totalorder %s25, 1
      %p59 = por %p57, %p58
      %p60 = scmp.ne.s32.totalorder %s51, %s52
      %p61 = scmp.eq.s32.totalorder %s25, 0
      %p62 = por %p60, %p61
      %p63 = scmp.ne.s32.totalorder %s51, %s52
      %p64 = scmp.eq.s32.totalorder %s26, 1
      %p65 = por %p63, %p64
      %p67 = scmp.ne.s32.totalorder %s52, %s66
      %p68 = scmp.eq.s32.totalorder %s26, 0
      %p69 = por %p67, %p68
      %s70 = ssub.s32 %s20, %s27
      %p71 = scmp.eq.s32.totalorder %s70, 0
      %s73 = sadd.s32 %s72, 1
      %s74 = scalar_select %p71, %s72, %s73
      %p77 = pneg %p71
      %p78 = scmp.eq.s32.totalorder %s20, 1
      %p79 = por %p77, %p78
      %p80 = scmp.ne.s32.totalorder %s72, %s75
      %p81 = scmp.eq.s32.totalorder %s20, 0
      %p82 = por %p80, %p81
      %p83 = scmp.ne.s32.totalorder %s72, %s75
      %p84 = scmp.eq.s32.totalorder %s25, 1
      %p85 = por %p83, %p84
      %p86 = scmp.ne.s32.totalorder %s75, %s76
      %p87 = scmp.eq.s32.totalorder %s25, 0
      %p88 = por %p86, %p87
      %p89 = scmp.ne.s32.totalorder %s75, %s76
      %p90 = scmp.eq.s32.totalorder %s26, 1
      %p91 = por %p89, %p90
      %p93 = scmp.ne.s32.totalorder %s76, %s92
      %p94 = scmp.eq.s32.totalorder %s26, 0
      %p95 = por %p93, %p94
      %s96 = ssub.s32 %s20, %s27
      %p97 = scmp.eq.s32.totalorder %s96, 0
      %s99 = sadd.s32 %s98, 1
      %s100 = scalar_select %p97, %s98, %s99
      %p103 = pneg %p97
      %p104 = scmp.eq.s32.totalorder %s20, 1
      %p105 = por %p103, %p104
      %p106 = scmp.ne.s32.totalorder %s98, %s101
      %p107 = scmp.eq.s32.totalorder %s20, 0
      %p108 = por %p106, %p107
      %p109 = scmp.ne.s32.totalorder %s98, %s101
      %p110 = scmp.eq.s32.totalorder %s25, 1
      %p111 = por %p109, %p110
      %p112 = scmp.ne.s32.totalorder %s101, %s102
      %p113 = scmp.eq.s32.totalorder %s25, 0
      %p114 = por %p112, %p113
      %p115 = scmp.ne.s32.totalorder %s101, %s102
      %p116 = scmp.eq.s32.totalorder %s26, 1
      %p117 = por %p115, %p116
      %p119 = scmp.ne.s32.totalorder %s102, %s118
      %p120 = scmp.eq.s32.totalorder %s26, 0
      %p121 = por %p119, %p120
      %s122 = ssub.s32 %s20, %s27
      %p123 = scmp.eq.s32.totalorder %s122, 0
      %s125 = sadd.s32 %s124, 1
      %s126 = scalar_select %p123, %s124, %s125
      %p129 = pneg %p123
      %p130 = scmp.eq.s32.totalorder %s20, 1
      %p131 = por %p129, %p130
      %p132 = scmp.ne.s32.totalorder %s124, %s127
      %p133 = scmp.eq.s32.totalorder %s20, 0
      %p134 = por %p132, %p133
      %p135 = scmp.ne.s32.totalorder %s124, %s127
      %p136 = scmp.eq.s32.totalorder %s25, 1
      %p137 = por %p135, %p136
      %p138 = scmp.ne.s32.totalorder %s127, %s128
      %p139 = scmp.eq.s32.totalorder %s25, 0
      %p140 = por %p138, %p139
      %p141 = scmp.ne.s32.totalorder %s127, %s128
      %p142 = scmp.eq.s32.totalorder %s26, 1
      %p143 = por %p141, %p142
      %p145 = scmp.ne.s32.totalorder %s128, %s144
      %p146 = scmp.eq.s32.totalorder %s26, 0
      %p147 = por %p145, %p146
      %s148 = ssub.s32 %s20, %s27
      %p149 = scmp.eq.s32.totalorder %s148, 0
      %s151 = sadd.s32 %s150, 1
      %s152 = scalar_select %p149, %s150, %s151
      %p155 = pneg %p149
      %p156 = scmp.eq.s32.totalorder %s20, 1
      %p157 = por %p155, %p156
      %p158 = scmp.ne.s32.totalorder %s150, %s153
      %p159 = scmp.eq.s32.totalorder %s20, 0
      %p160 = por %p158, %p159
      %p161 = scmp.ne.s32.totalorder %s150, %s153
      %p162 = scmp.eq.s32.totalorder %s25, 1
      %p163 = por %p161, %p162
      %p164 = scmp.ne.s32.totalorder %s153, %s154
      %p165 = scmp.eq.s32.totalorder %s25, 0
      %p166 = por %p164, %p165
      %p167 = scmp.ne.s32.totalorder %s153, %s154
      %p168 = scmp.eq.s32.totalorder %s26, 1
      %p169 = por %p167, %p168
      %p171 = scmp.ne.s32.totalorder %s154, %s170
      %p172 = scmp.eq.s32.totalorder %s26, 0
      %p173 = por %p171, %p172
      %s174 = ssub.s32 %s20, %s27
      %p175 = scmp.eq.s32.totalorder %s174, 0
      %s177 = sadd.s32 %s176, 1
      %s178 = scalar_select %p175, %s176, %s177
      %p181 = pneg %p175
      %p182 = scmp.eq.s32.totalorder %s20, 1
      %p183 = por %p181, %p182
      %p184 = scmp.ne.s32.totalorder %s176, %s179
      %p185 = scmp.eq.s32.totalorder %s20, 0
      %p186 = por %p184, %p185
      %p187 = scmp.ne.s32.totalorder %s176, %s179
      %p188 = scmp.eq.s32.totalorder %s25, 1
      %p189 = por %p187, %p188
      %p190 = scmp.ne.s32.totalorder %s179, %s180
      %p191 = scmp.eq.s32.totalorder %s25, 0
      %p192 = por %p190, %p191
      %p193 = scmp.ne.s32.totalorder %s179, %s180
      %p194 = scmp.eq.s32.totalorder %s26, 1
      %p195 = por %p193, %p194
      %p197 = scmp.ne.s32.totalorder %s180, %s196
      %p198 = scmp.eq.s32.totalorder %s26, 0
      %p199 = por %p197, %p198
      %p200 = scmp.le.s32.totalorder 1, %s20
      %p201 = scmp.lt.s32.totalorder %s20, 3
      %p202 = pnand %p200, %p201
      %p203 = pneg %p202
      // Predicated region
      $region9: #{encoder_text_forward.4} parent=5 // pred_check
        _
      $region10: #{encoder_text_forward.4} parent=5 // pred_check_branch
        %205 = sbr.rel (%p202) target = $region12
      $region11: #{encoder_text_forward.4} parent=5 // pred_region
        %s206 = ssub.s32 %s20, 1
        // Predicated region
        $region13: #{encoder_text_forward.4} parent=11 // pred_check
          %p207 = pneg %p41
        $region14: #{encoder_text_forward.4} parent=11 // pred_check_branch
          %209 = sbr.rel (%p207) target = $region16
        $region15: #{encoder_text_forward.4} parent=11 // pred_region
          _
        $region16: #{encoder_text_forward.4} parent=11 // pred_fallthru
          _
        // Predicated region
        $region17: #{encoder_text_forward.4} parent=11 // pred_check
          %p210 = pneg %p62
        $region18: #{encoder_text_forward.4} parent=11 // pred_check_branch
          %212 = sbr.rel (%p210) target = $region20
        $region19: #{encoder_text_forward.4} parent=11 // pred_region
          _
        $region20: #{encoder_text_forward.4} parent=11 // pred_fallthru
          _
      $region12: #{encoder_text_forward.4} parent=5 // pred_fallthru
        _
      %p213 = scmp.lt.s32.totalorder %s20, 2
      // Predicated region
      $region21: #{encoder_text_forward.4} parent=5 // pred_check
        %p214 = pneg %p213
      $region22: #{encoder_text_forward.4} parent=5 // pred_check_branch
        %216 = sbr.rel (%p214) target = $region24
      $region23: #{encoder_text_forward.4} parent=5 // pred_region
        // Predicated region
        $region25: #{encoder_text_forward.4} parent=23 // pred_check
          %p217 = pneg %p82
        $region26: #{encoder_text_forward.4} parent=23 // pred_check_branch
          %219 = sbr.rel (%p217) target = $region28
        $region27: #{encoder_text_forward.4} parent=23 // pred_region
          %s220 = sand.u32 %s72, 1
          %s221 = scalar_lea.sflag [#allocation7], %s220
          %s222 = sand.u32 %s72, 1
          %s223 = smul.addr %s222, 768
          %s224 = scalar_lea.vmem [#allocation6], %s223
          %226 = vsyncadd %s221, 0
          %s227 = smul.addr %s20, 96
          %s228 = smul.addr %s227, 8
          %s229 = scalar_lea.hbm %s3, %s228
          %s230 = sshll.u32 %s229, 4
          %s231 = int_to_ptr.hbm [resolvable:$true] %s230
          %s232 = sshll.u32 %s224, 4
          %s233 = int_to_ptr.vmem [resolvable:$true] %s232
          %238 = dma.hbm_to_vmem [thread:$0]  %s231, 12288, %s233, %s221, 384, 384, 24
        $region28: #{encoder_text_forward.4} parent=23 // pred_fallthru
          _
        // Predicated region
        $region29: #{encoder_text_forward.4} parent=23 // pred_check
          %p239 = pneg %p108
        $region30: #{encoder_text_forward.4} parent=23 // pred_check_branch
          %241 = sbr.rel (%p239) target = $region32
        $region31: #{encoder_text_forward.4} parent=23 // pred_region
          %s242 = sand.u32 %s98, 1
          %s243 = scalar_lea.sflag [#allocation9], %s242
          %s244 = sand.u32 %s98, 1
          %s245 = smul.addr %s244, 384
          %s246 = scalar_lea.vmem [#allocation8], %s245
          %248 = vsyncadd %s243, 0
          %s249 = smul.addr %s20, 48
          %s250 = smul.addr %s249, 8
          %s251 = scalar_lea.hbm %s4, %s250
          %s252 = sshll.u32 %s251, 4
          %s253 = int_to_ptr.hbm [resolvable:$true] %s252
          %s254 = sshll.u32 %s246, 4
          %s255 = int_to_ptr.vmem [resolvable:$true] %s254
          %260 = dma.hbm_to_vmem [thread:$0]  %s253, 6144, %s255, %s243, 384, 384, 24
        $region32: #{encoder_text_forward.4} parent=23 // pred_fallthru
          _
        // Predicated region
        $region33: #{encoder_text_forward.4} parent=23 // pred_check
          %p261 = pneg %p134
        $region34: #{encoder_text_forward.4} parent=23 // pred_check_branch
          %263 = sbr.rel (%p261) target = $region36
        $region35: #{encoder_text_forward.4} parent=23 // pred_region
          %p264 = scmp.lt.s32.totalorder %s20, 1
          %s265 = scalar_select %p264, %s20, 1
          %s266 = smul.addr %s265, 3
          %s267 = scalar_lea.vmem %s5, %s266
        $region36: #{encoder_text_forward.4} parent=23 // pred_fallthru
          _
        // Predicated region
        $region37: #{encoder_text_forward.4} parent=23 // pred_check
          %p268 = pneg %p160
        $region38: #{encoder_text_forward.4} parent=23 // pred_check_branch
          %270 = sbr.rel (%p268) target = $region40
        $region39: #{encoder_text_forward.4} parent=23 // pred_region
          %p271 = scmp.lt.s32.totalorder %s20, 1
          %s272 = scalar_select %p271, %s20, 1
          %s273 = scalar_lea.vmem %s6, %s272
        $region40: #{encoder_text_forward.4} parent=23 // pred_fallthru
          _
      $region24: #{encoder_text_forward.4} parent=5 // pred_fallthru
        _
      %p274 = scmp.le.s32.totalorder 1, %s20
      %p275 = scmp.lt.s32.totalorder %s20, 3
      %p276 = pnand %p274, %p275
      %p277 = pneg %p276
      // Predicated region
      $region41: #{encoder_text_forward.4} parent=5 // pred_check
        _
      $region42: #{encoder_text_forward.4} parent=5 // pred_check_branch
        %279 = sbr.rel (%p276) target = $region44
      $region43: #{encoder_text_forward.4} parent=5 // pred_region
        %s280 = ssub.s32 %s20, 1
        %s281 = sand.u32 %s75, 1
        %s282 = scalar_lea.sflag [#allocation7], %s281
        %s283 = sand.u32 %s75, 1
        %s284 = smul.addr %s283, 768
        %s285 = scalar_lea.vmem [#allocation6], %s284
        // Predicated region
        $region45: #{encoder_text_forward.4} parent=43 // pred_check
          %p286 = pneg %p88
        $region46: #{encoder_text_forward.4} parent=43 // pred_check_branch
          %288 = sbr.rel (%p286) target = $region48
        $region47: #{encoder_text_forward.4} parent=43 // pred_region
          %290 = dma.done %s282, 12288
        $region48: #{encoder_text_forward.4} parent=43 // pred_fallthru
          _
        %s291 = sand.u32 %s101, 1
        %s292 = scalar_lea.sflag [#allocation9], %s291
        %s293 = sand.u32 %s101, 1
        %s294 = smul.addr %s293, 384
        %s295 = scalar_lea.vmem [#allocation8], %s294
        // Predicated region
        $region49: #{encoder_text_forward.4} parent=43 // pred_check
          %p296 = pneg %p114
        $region50: #{encoder_text_forward.4} parent=43 // pred_check_branch
          %298 = sbr.rel (%p296) target = $region52
        $region51: #{encoder_text_forward.4} parent=43 // pred_region
          %300 = dma.done %s292, 6144
        $region52: #{encoder_text_forward.4} parent=43 // pred_fallthru
          _
        %p301 = pneg %p41
        %p302 = pneg %p38
        %p303 = pneg %p62
        %p304 = pneg %p59
        %s305 = sand.u32 %s75, 1
        %s306 = scalar_lea.sflag [#allocation7], %s305
        %s307 = sand.u32 %s75, 1
        %s308 = smul.addr %s307, 768
        %s309 = scalar_lea.vmem [#allocation6], %s308
        %p310 = pneg %p88
        %p311 = pneg %p85
        %s312 = sand.u32 %s101, 1
        %s313 = scalar_lea.sflag [#allocation9], %s312
        %s314 = sand.u32 %s101, 1
        %s315 = smul.addr %s314, 384
        %s316 = scalar_lea.vmem [#allocation8], %s315
        %p317 = pneg %p114
        %p318 = pneg %p111
        %p319 = scmp.lt.s32.totalorder %s25, 1
        %s320 = scalar_select %p319, %s25, 1
        %s321 = smul.addr %s320, 3
        %s322 = scalar_lea.vmem %s5, %s321
        %p323 = pneg %p140
        %p324 = pneg %p137
        %p325 = scmp.lt.s32.totalorder %s25, 1
        %s326 = scalar_select %p325, %s25, 1
        %s327 = scalar_lea.vmem %s6, %s326
        %p328 = pneg %p166
        %p329 = pneg %p163
        %p330 = pneg %p192
        %p331 = pneg %p189
        %s332 = sand.u32 %s179, 1
        %s333 = sand.u32 %s179, 1
        %s334 = smul.addr %s333, 64
        %s335 = scalar_lea.vmem [#allocation10], %s334
        %p336 = scmp.lt.s32.totalorder %s25, 1
        %s337 = scalar_select %p336, %s25, 1
        %s338 = smul.addr %s337, 3
        %s339 = scalar_lea.vmem %s5, %s338
        %p340 = scmp.lt.s32.totalorder %s25, 1
        %s341 = scalar_select %p340, %s25, 1
        %s342 = scalar_lea.vmem %s6, %s341
        %s343 = sld [smem:[#allocation5]]
        %v344 = vld [vmem:[%s1] sm:$0xff]
        %v345 = vld [vmem:[%s1 + $0x8] sm:$0xff]
        %v346 = vld [vmem:[%s1 + $0x10] sm:$0xff]
        %v347 = vld [vmem:[%s1 + $0x18] sm:$0xff]
        %v348 = vld [vmem:[%s1 + $0x20] sm:$0xff]
        %v349 = vld [vmem:[%s1 + $0x28] sm:$0xff]
        %v350 = vld [vmem:[%s1 + $0x30] sm:$0xff]
        %v351 = vld [vmem:[%s1 + $0x38] sm:$0xff]
        %v352 = vld [vmem:[%s1 + $0x40] sm:$0xff]
        %v353 = vld [vmem:[%s1 + $0x48] sm:$0xff]
        %v354 = vld [vmem:[%s1 + $0x50] sm:$0xff]
        %v355 = vld [vmem:[%s1 + $0x58] sm:$0xff]
        %v356 = vld [vmem:[%s1 + $0x60] sm:$0xff]
        %v357 = vld [vmem:[%s1 + $0x68] sm:$0xff]
        %v358 = vld [vmem:[%s1 + $0x70] sm:$0xff]
        %v359 = vld [vmem:[%s1 + $0x78] sm:$0xff]
        %v360 = vld [vmem:[%s285] sm:$0xff]
        %v361 = vld [vmem:[%s285 + $0x8] sm:$0xff]
        %v362 = vld [vmem:[%s285 + $0x10] sm:$0xff]
        %v363 = vld [vmem:[%s285 + $0x18] sm:$0xff]
        %v364 = vld [vmem:[%s285 + $0x20] sm:$0xff]
        %v365 = vld [vmem:[%s285 + $0x28] sm:$0xff]
        %v366 = vld [vmem:[%s285 + $0x30] sm:$0xff]
        %v367 = vld [vmem:[%s285 + $0x38] sm:$0xff]
        %v368 = vld [vmem:[%s285 + $0x40] sm:$0xff]
        %v369 = vld [vmem:[%s285 + $0x48] sm:$0xff]
        %v370 = vld [vmem:[%s285 + $0x50] sm:$0xff]
        %v371 = vld [vmem:[%s285 + $0x58] sm:$0xff]
        %v372 = vld [vmem:[%s285 + $0x60] sm:$0xff]
        %v373 = vld [vmem:[%s285 + $0x68] sm:$0xff]
        %v374 = vld [vmem:[%s285 + $0x70] sm:$0xff]
        %v375 = vld [vmem:[%s285 + $0x78] sm:$0xff]
        %v376 = vld [vmem:[%s285 + $0x80] sm:$0xff]
        %v377 = vld [vmem:[%s285 + $0x88] sm:$0xff]
        %v378 = vld [vmem:[%s285 + $0x90] sm:$0xff]
        %v379 = vld [vmem:[%s285 + $0x98] sm:$0xff]
        %v380 = vld [vmem:[%s285 + $0xa0] sm:$0xff]
        %v381 = vld [vmem:[%s285 + $0xa8] sm:$0xff]
        %v382 = vld [vmem:[%s285 + $0xb0] sm:$0xff]
        %v383 = vld [vmem:[%s285 + $0xb8] sm:$0xff]
        %v384 = vld [vmem:[%s285 + $0xc0] sm:$0xff]
        %v385 = vld [vmem:[%s285 + $0xc8] sm:$0xff]
        %v386 = vld [vmem:[%s285 + $0xd0] sm:$0xff]
        %v387 = vld [vmem:[%s285 + $0xd8] sm:$0xff]
        %v388 = vld [vmem:[%s285 + $0xe0] sm:$0xff]
        %v389 = vld [vmem:[%s285 + $0xe8] sm:$0xff]
        %v390 = vld [vmem:[%s285 + $0xf0] sm:$0xff]
        %v391 = vld [vmem:[%s285 + $0xf8] sm:$0xff]
        %v392 = vld [vmem:[%s285 + $0x100] sm:$0xff]
        %v393 = vld [vmem:[%s285 + $0x108] sm:$0xff]
        %v394 = vld [vmem:[%s285 + $0x110] sm:$0xff]
        %v395 = vld [vmem:[%s285 + $0x118] sm:$0xff]
        %v396 = vld [vmem:[%s285 + $0x120] sm:$0xff]
        %v397 = vld [vmem:[%s285 + $0x128] sm:$0xff]
        %v398 = vld [vmem:[%s285 + $0x130] sm:$0xff]
        %v399 = vld [vmem:[%s285 + $0x138] sm:$0xff]
        %v400 = vld [vmem:[%s285 + $0x140] sm:$0xff]
        %v401 = vld [vmem:[%s285 + $0x148] sm:$0xff]
        %v402 = vld [vmem:[%s285 + $0x150] sm:$0xff]
        %v403 = vld [vmem:[%s285 + $0x158] sm:$0xff]
        %v404 = vld [vmem:[%s285 + $0x160] sm:$0xff]
        %v405 = vld [vmem:[%s285 + $0x168] sm:$0xff]
        %v406 = vld [vmem:[%s285 + $0x170] sm:$0xff]
        %v407 = vld [vmem:[%s285 + $0x178] sm:$0xff]
        %v408 = vld [vmem:[%s285 + $0x180] sm:$0xff]
        %v409 = vld [vmem:[%s285 + $0x188] sm:$0xff]
        %v410 = vld [vmem:[%s285 + $0x190] sm:$0xff]
        %v411 = vld [vmem:[%s285 + $0x198] sm:$0xff]
        %v412 = vld [vmem:[%s285 + $0x1a0] sm:$0xff]
        %v413 = vld [vmem:[%s285 + $0x1a8] sm:$0xff]
        %v414 = vld [vmem:[%s285 + $0x1b0] sm:$0xff]
        %v415 = vld [vmem:[%s285 + $0x1b8] sm:$0xff]
        %v416 = vld [vmem:[%s285 + $0x1c0] sm:$0xff]
        %v417 = vld [vmem:[%s285 + $0x1c8] sm:$0xff]
        %v418 = vld [vmem:[%s285 + $0x1d0] sm:$0xff]
        %v419 = vld [vmem:[%s285 + $0x1d8] sm:$0xff]
        %v420 = vld [vmem:[%s285 + $0x1e0] sm:$0xff]
        %v421 = vld [vmem:[%s285 + $0x1e8] sm:$0xff]
        %v422 = vld [vmem:[%s285 + $0x1f0] sm:$0xff]
        %v423 = vld [vmem:[%s285 + $0x1f8] sm:$0xff]
        %v424 = vld [vmem:[%s285 + $0x200] sm:$0xff]
        %v425 = vld [vmem:[%s285 + $0x208] sm:$0xff]
        %v426 = vld [vmem:[%s285 + $0x210] sm:$0xff]
        %v427 = vld [vmem:[%s285 + $0x218] sm:$0xff]
        %v428 = vld [vmem:[%s285 + $0x220] sm:$0xff]
        %v429 = vld [vmem:[%s285 + $0x228] sm:$0xff]
        %v430 = vld [vmem:[%s285 + $0x230] sm:$0xff]
        %v431 = vld [vmem:[%s285 + $0x238] sm:$0xff]
        %v432 = vld [vmem:[%s285 + $0x240] sm:$0xff]
        %v433 = vld [vmem:[%s285 + $0x248] sm:$0xff]
        %v434 = vld [vmem:[%s285 + $0x250] sm:$0xff]
        %v435 = vld [vmem:[%s285 + $0x258] sm:$0xff]
        %v436 = vld [vmem:[%s285 + $0x260] sm:$0xff]
        %v437 = vld [vmem:[%s285 + $0x268] sm:$0xff]
        %v438 = vld [vmem:[%s285 + $0x270] sm:$0xff]
        %v439 = vld [vmem:[%s285 + $0x278] sm:$0xff]
        %v440 = vld [vmem:[%s285 + $0x280] sm:$0xff]
        %v441 = vld [vmem:[%s285 + $0x288] sm:$0xff]
        %v442 = vld [vmem:[%s285 + $0x290] sm:$0xff]
        %v443 = vld [vmem:[%s285 + $0x298] sm:$0xff]
        %v444 = vld [vmem:[%s285 + $0x2a0] sm:$0xff]
        %v445 = vld [vmem:[%s285 + $0x2a8] sm:$0xff]
        %v446 = vld [vmem:[%s285 + $0x2b0] sm:$0xff]
        %v447 = vld [vmem:[%s285 + $0x2b8] sm:$0xff]
        %v448 = vld [vmem:[%s285 + $0x2c0] sm:$0xff]
        %v449 = vld [vmem:[%s285 + $0x2c8] sm:$0xff]
        %v450 = vld [vmem:[%s285 + $0x2d0] sm:$0xff]
        %v451 = vld [vmem:[%s285 + $0x2d8] sm:$0xff]
        %v452 = vld [vmem:[%s285 + $0x2e0] sm:$0xff]
        %v453 = vld [vmem:[%s285 + $0x2e8] sm:$0xff]
        %v454 = vld [vmem:[%s285 + $0x2f0] sm:$0xff]
        %v455 = vld [vmem:[%s285 + $0x2f8] sm:$0xff]
        %v456 = vld [vmem:[%s339] sm:$0x7]
        %v458 = vperm.slane %v456, 0
        %v459 = vperm.slane %v456, 1
        %v460 = vperm.slane %v456, 2
        %464 = vmatpush.msra.mxu0 %v405
        %465 = vmatpush.msra.mxu0 %v402
        %466 = vmatpush.msra.mxu0 %v399
        %467 = vmatpush.msra.mxu0 %v396
        %468 = vmatpush.msra.mxu0 %v393
        %469 = vmatpush.msra.mxu0 %v390
        %470 = vmatpush.msra.mxu0 %v387
        %471 = vmatpush.msra.mxu0 %v384
        %472 = vmatpush.msra.mxu0 %v381
        %473 = vmatpush.msra.mxu0 %v378
        %474 = vmatpush.msra.mxu0 %v375
        %475 = vmatpush.msra.mxu0 %v372
        %476 = vmatpush.msra.mxu0 %v369
        %477 = vmatpush.msra.mxu0 %v366
        %478 = vmatpush.msra.mxu0 %v363
        %479 = vmatpush.msra.mxu0 %v360
        %480 = vmatmul.f32.gmra.mxu0 %v344
        %v481 = vpop.f32.mrf.mxu0
        %v482 = vadd.f32 %v458, %v481
        %483 = vmatmul.f32.gmra.mxu0 %v346
        %v484 = vpop.f32.mrf.mxu0
        %v485 = vadd.f32 %v458, %v484
        %486 = vmatmul.f32.gmra.mxu0 %v348
        %v487 = vpop.f32.mrf.mxu0
        %v488 = vadd.f32 %v458, %v487
        %489 = vmatmul.f32.gmra.mxu0 %v350
        %v490 = vpop.f32.mrf.mxu0
        %v491 = vadd.f32 %v458, %v490
        %492 = vmatmul.f32.gmra.mxu0 %v352
        %v493 = vpop.f32.mrf.mxu0
        %v494 = vadd.f32 %v458, %v493
        %495 = vmatmul.f32.gmra.mxu0 %v354
        %v496 = vpop.f32.mrf.mxu0
        %v497 = vadd.f32 %v458, %v496
        %498 = vmatmul.f32.gmra.mxu0 %v356
        %v499 = vpop.f32.mrf.mxu0
        %v500 = vadd.f32 %v458, %v499
        %501 = vmatmul.f32.gmra.mxu0 %v358
        %v502 = vpop.f32.mrf.mxu0
        %v503 = vadd.f32 %v458, %v502
        %504 = vdwg.mxu0
        %505 = vmatpush.msra.mxu0 %v453
        %506 = vmatpush.msra.mxu0 %v450
        %507 = vmatpush.msra.mxu0 %v447
        %508 = vmatpush.msra.mxu0 %v444
        %509 = vmatpush.msra.mxu0 %v441
        %510 = vmatpush.msra.mxu0 %v438
        %511 = vmatpush.msra.mxu0 %v435
        %512 = vmatpush.msra.mxu0 %v432
        %513 = vmatpush.msra.mxu0 %v429
        %514 = vmatpush.msra.mxu0 %v426
        %515 = vmatpush.msra.mxu0 %v423
        %516 = vmatpush.msra.mxu0 %v420
        %517 = vmatpush.msra.mxu0 %v417
        %518 = vmatpush.msra.mxu0 %v414
        %519 = vmatpush.msra.mxu0 %v411
        %520 = vmatpush.msra.mxu0 %v408
        %521 = vmatmul.f32.gmra.mxu0 %v345
        %v522 = vpop.f32.mrf.mxu0
        %v523 = vadd.f32 %v482, %v522
        %524 = vmatmul.f32.gmra.mxu0 %v347
        %v525 = vpop.f32.mrf.mxu0
        %v526 = vadd.f32 %v485, %v525
        %527 = vmatmul.f32.gmra.mxu0 %v349
        %v528 = vpop.f32.mrf.mxu0
        %v529 = vadd.f32 %v488, %v528
        %530 = vmatmul.f32.gmra.mxu0 %v351
        %v531 = vpop.f32.mrf.mxu0
        %v532 = vadd.f32 %v491, %v531
        %533 = vmatmul.f32.gmra.mxu0 %v353
        %v534 = vpop.f32.mrf.mxu0
        %v535 = vadd.f32 %v494, %v534
        %536 = vmatmul.f32.gmra.mxu0 %v355
        %v537 = vpop.f32.mrf.mxu0
        %v538 = vadd.f32 %v497, %v537
        %539 = vmatmul.f32.gmra.mxu0 %v357
        %v540 = vpop.f32.mrf.mxu0
        %v541 = vadd.f32 %v500, %v540
        %542 = vmatmul.f32.gmra.mxu0 %v359
        %v543 = vpop.f32.mrf.mxu0
        %v544 = vadd.f32 %v503, %v543
        %545 = vdwg.mxu0
        %546 = vmatpush.msra.mxu0 %v406
        %547 = vmatpush.msra.mxu0 %v403
        %548 = vmatpush.msra.mxu0 %v400
        %549 = vmatpush.msra.mxu0 %v397
        %550 = vmatpush.msra.mxu0 %v394
        %551 = vmatpush.msra.mxu0 %v391
        %552 = vmatpush.msra.mxu0 %v388
        %553 = vmatpush.msra.mxu0 %v385
        %554 = vmatpush.msra.mxu0 %v382
        %555 = vmatpush.msra.mxu0 %v379
        %556 = vmatpush.msra.mxu0 %v376
        %557 = vmatpush.msra.mxu0 %v373
        %558 = vmatpush.msra.mxu0 %v370
        %559 = vmatpush.msra.mxu0 %v367
        %560 = vmatpush.msra.mxu0 %v364
        %561 = vmatpush.msra.mxu0 %v361
        %562 = vmatmul.f32.gmra.mxu0 %v344
        %v563 = vpop.f32.mrf.mxu0
        %v564 = vadd.f32 %v459, %v563
        %565 = vmatmul.f32.gmra.mxu0 %v346
        %v566 = vpop.f32.mrf.mxu0
        %v567 = vadd.f32 %v459, %v566
        %568 = vmatmul.f32.gmra.mxu0 %v348
        %v569 = vpop.f32.mrf.mxu0
        %v570 = vadd.f32 %v459, %v569
        %571 = vmatmul.f32.gmra.mxu0 %v350
        %v572 = vpop.f32.mrf.mxu0
        %v573 = vadd.f32 %v459, %v572
        %574 = vmatmul.f32.gmra.mxu0 %v352
        %v575 = vpop.f32.mrf.mxu0
        %v576 = vadd.f32 %v459, %v575
        %577 = vmatmul.f32.gmra.mxu0 %v354
        %v578 = vpop.f32.mrf.mxu0
        %v579 = vadd.f32 %v459, %v578
        %580 = vmatmul.f32.gmra.mxu0 %v356
        %v581 = vpop.f32.mrf.mxu0
        %v582 = vadd.f32 %v459, %v581
        %583 = vmatmul.f32.gmra.mxu0 %v358
        %v584 = vpop.f32.mrf.mxu0
        %v585 = vadd.f32 %v459, %v584
        %586 = vdwg.mxu0
        %587 = vmatpush.msra.mxu0 %v454
        %588 = vmatpush.msra.mxu0 %v451
        %589 = vmatpush.msra.mxu0 %v448
        %590 = vmatpush.msra.mxu0 %v445
        %591 = vmatpush.msra.mxu0 %v442
        %592 = vmatpush.msra.mxu0 %v439
        %593 = vmatpush.msra.mxu0 %v436
        %594 = vmatpush.msra.mxu0 %v433
        %595 = vmatpush.msra.mxu0 %v430
        %596 = vmatpush.msra.mxu0 %v427
        %597 = vmatpush.msra.mxu0 %v424
        %598 = vmatpush.msra.mxu0 %v421
        %599 = vmatpush.msra.mxu0 %v418
        %600 = vmatpush.msra.mxu0 %v415
        %601 = vmatpush.msra.mxu0 %v412
        %602 = vmatpush.msra.mxu0 %v409
        %603 = vmatmul.f32.gmra.mxu0 %v345
        %v604 = vpop.f32.mrf.mxu0
        %v605 = vadd.f32 %v564, %v604
        %606 = vmatmul.f32.gmra.mxu0 %v347
        %v607 = vpop.f32.mrf.mxu0
        %v608 = vadd.f32 %v567, %v607
        %609 = vmatmul.f32.gmra.mxu0 %v349
        %v610 = vpop.f32.mrf.mxu0
        %v611 = vadd.f32 %v570, %v610
        %612 = vmatmul.f32.gmra.mxu0 %v351
        %v613 = vpop.f32.mrf.mxu0
        %v614 = vadd.f32 %v573, %v613
        %615 = vmatmul.f32.gmra.mxu0 %v353
        %v616 = vpop.f32.mrf.mxu0
        %v617 = vadd.f32 %v576, %v616
        %618 = vmatmul.f32.gmra.mxu0 %v355
        %v619 = vpop.f32.mrf.mxu0
        %v620 = vadd.f32 %v579, %v619
        %621 = vmatmul.f32.gmra.mxu0 %v357
        %v622 = vpop.f32.mrf.mxu0
        %v623 = vadd.f32 %v582, %v622
        %624 = vmatmul.f32.gmra.mxu0 %v359
        %v625 = vpop.f32.mrf.mxu0
        %v626 = vadd.f32 %v585, %v625
        %627 = vdwg.mxu0
        %628 = vmatpush.msra.mxu0 %v407
        %629 = vmatpush.msra.mxu0 %v404
        %630 = vmatpush.msra.mxu0 %v401
        %631 = vmatpush.msra.mxu0 %v398
        %632 = vmatpush.msra.mxu0 %v395
        %633 = vmatpush.msra.mxu0 %v392
        %634 = vmatpush.msra.mxu0 %v389
        %635 = vmatpush.msra.mxu0 %v386
        %636 = vmatpush.msra.mxu0 %v383
        %637 = vmatpush.msra.mxu0 %v380
        %638 = vmatpush.msra.mxu0 %v377
        %639 = vmatpush.msra.mxu0 %v374
        %640 = vmatpush.msra.mxu0 %v371
        %641 = vmatpush.msra.mxu0 %v368
        %642 = vmatpush.msra.mxu0 %v365
        %643 = vmatpush.msra.mxu0 %v362
        %644 = vmatmul.f32.gmra.mxu0 %v344
        %v645 = vpop.f32.mrf.mxu0
        %v646 = vadd.f32 %v460, %v645
        %647 = vmatmul.f32.gmra.mxu0 %v346
        %v648 = vpop.f32.mrf.mxu0
        %v649 = vadd.f32 %v460, %v648
        %650 = vmatmul.f32.gmra.mxu0 %v348
        %v651 = vpop.f32.mrf.mxu0
        %v652 = vadd.f32 %v460, %v651
        %653 = vmatmul.f32.gmra.mxu0 %v350
        %v654 = vpop.f32.mrf.mxu0
        %v655 = vadd.f32 %v460, %v654
        %656 = vmatmul.f32.gmra.mxu0 %v352
        %v657 = vpop.f32.mrf.mxu0
        %v658 = vadd.f32 %v460, %v657
        %659 = vmatmul.f32.gmra.mxu0 %v354
        %v660 = vpop.f32.mrf.mxu0
        %v661 = vadd.f32 %v460, %v660
        %662 = vmatmul.f32.gmra.mxu0 %v356
        %v663 = vpop.f32.mrf.mxu0
        %v664 = vadd.f32 %v460, %v663
        %665 = vmatmul.f32.gmra.mxu0 %v358
        %v666 = vpop.f32.mrf.mxu0
        %v667 = vadd.f32 %v460, %v666
        %668 = vdwg.mxu0
        %669 = vmatpush.msra.mxu0 %v455
        %670 = vmatpush.msra.mxu0 %v452
        %671 = vmatpush.msra.mxu0 %v449
        %672 = vmatpush.msra.mxu0 %v446
        %673 = vmatpush.msra.mxu0 %v443
        %674 = vmatpush.msra.mxu0 %v440
        %675 = vmatpush.msra.mxu0 %v437
        %676 = vmatpush.msra.mxu0 %v434
        %677 = vmatpush.msra.mxu0 %v431
        %678 = vmatpush.msra.mxu0 %v428
        %679 = vmatpush.msra.mxu0 %v425
        %680 = vmatpush.msra.mxu0 %v422
        %681 = vmatpush.msra.mxu0 %v419
        %682 = vmatpush.msra.mxu0 %v416
        %683 = vmatpush.msra.mxu0 %v413
        %684 = vmatpush.msra.mxu0 %v410
        %685 = vmatmul.f32.gmra.mxu0 %v345
        %v686 = vpop.f32.mrf.mxu0
        %v687 = vadd.f32 %v646, %v686
        %688 = vmatmul.f32.gmra.mxu0 %v347
        %v689 = vpop.f32.mrf.mxu0
        %v690 = vadd.f32 %v649, %v689
        %691 = vmatmul.f32.gmra.mxu0 %v349
        %v692 = vpop.f32.mrf.mxu0
        %v693 = vadd.f32 %v652, %v692
        %694 = vmatmul.f32.gmra.mxu0 %v351
        %v695 = vpop.f32.mrf.mxu0
        %v696 = vadd.f32 %v655, %v695
        %697 = vmatmul.f32.gmra.mxu0 %v353
        %v698 = vpop.f32.mrf.mxu0
        %v699 = vadd.f32 %v658, %v698
        %700 = vmatmul.f32.gmra.mxu0 %v355
        %v701 = vpop.f32.mrf.mxu0
        %v702 = vadd.f32 %v661, %v701
        %703 = vmatmul.f32.gmra.mxu0 %v357
        %v704 = vpop.f32.mrf.mxu0
        %v705 = vadd.f32 %v664, %v704
        %706 = vmatmul.f32.gmra.mxu0 %v359
        %v707 = vpop.f32.mrf.mxu0
        %v708 = vadd.f32 %v667, %v707
        %709 = vdwg.mxu0
        %710 = vst [vmem:[#allocation2] sm:$0xff] %v523
        %711 = vst [vmem:[#allocation2 + $0x8] sm:$0xff] %v605
        %712 = vst [vmem:[#allocation2 + $0x10] sm:$0xff] %v687
        %713 = vst [vmem:[#allocation2 + $0x18] sm:$0xff] %v526
        %714 = vst [vmem:[#allocation2 + $0x20] sm:$0xff] %v608
        %715 = vst [vmem:[#allocation2 + $0x28] sm:$0xff] %v690
        %716 = vst [vmem:[#allocation2 + $0x30] sm:$0xff] %v529
        %717 = vst [vmem:[#allocation2 + $0x38] sm:$0xff] %v611
        %718 = vst [vmem:[#allocation2 + $0x40] sm:$0xff] %v693
        %719 = vst [vmem:[#allocation2 + $0x48] sm:$0xff] %v532
        %720 = vst [vmem:[#allocation2 + $0x50] sm:$0xff] %v614
        %721 = vst [vmem:[#allocation2 + $0x58] sm:$0xff] %v696
        %722 = vst [vmem:[#allocation2 + $0x60] sm:$0xff] %v535
        %723 = vst [vmem:[#allocation2 + $0x68] sm:$0xff] %v617
        %724 = vst [vmem:[#allocation2 + $0x70] sm:$0xff] %v699
        %725 = vst [vmem:[#allocation2 + $0x78] sm:$0xff] %v538
        %726 = vst [vmem:[#allocation2 + $0x80] sm:$0xff] %v620
        %727 = vst [vmem:[#allocation2 + $0x88] sm:$0xff] %v702
        %728 = vst [vmem:[#allocation2 + $0x90] sm:$0xff] %v541
        %729 = vst [vmem:[#allocation2 + $0x98] sm:$0xff] %v623
        %730 = vst [vmem:[#allocation2 + $0xa0] sm:$0xff] %v705
        %731 = vst [vmem:[#allocation2 + $0xa8] sm:$0xff] %v544
        %732 = vst [vmem:[#allocation2 + $0xb0] sm:$0xff] %v626
        %733 = vst [vmem:[#allocation2 + $0xb8] sm:$0xff] %v708
        %734 = vst [vmem:[#allocation3] sm:$0xff] 0.0
        %p735 = scmp.lt.s32.totalorder %s343, 8
        // Predicated region
        $region53: #{encoder_text_forward.4} parent=43 // pred_check
          %p736 = pneg %p735
        $region54: #{encoder_text_forward.4} parent=43 // pred_check_branch
          %738 = sbr.rel (%p736) target = $region56
        $region55: #{encoder_text_forward.4} parent=43 // pred_region
          %739 = vst [vmem:[%s335] sm:$0xff] 0.0
          %740 = vst [vmem:[%s335 + $0x8] sm:$0xff] 0.0
          %741 = vst [vmem:[%s335 + $0x10] sm:$0xff] 0.0
          %742 = vst [vmem:[%s335 + $0x18] sm:$0xff] 0.0
          %743 = vst [vmem:[%s335 + $0x20] sm:$0xff] 0.0
          %744 = vst [vmem:[%s335 + $0x28] sm:$0xff] 0.0
          %745 = vst [vmem:[%s335 + $0x30] sm:$0xff] 0.0
          %746 = vst [vmem:[%s335 + $0x38] sm:$0xff] 0.0
        $region56: #{encoder_text_forward.4} parent=43 // pred_fallthru
          _
        %v747 = vld [vmem:[%s2] sm:$0xff]
        %v748 = vld [vmem:[%s342] sm:$0x1]
        %v750 = vperm.slane %v748, 0
        // While loop
        $region57: #{encoder_text_forward.4} parent=43 // loop_pre_header
          _
        $region58: #{encoder_text_forward.4} parent=43 // loop_header
          %s753 = sphi 0, %s755
          %p754 = scmp.ge.s32.totalorder %s753, %s343
        $region59: #{encoder_text_forward.4} parent=43 // loop_header_branch
          %757 = sbr.rel (%p754) target = $region63
        $region60: #{encoder_text_forward.4} parent=43 // loop_body
          %p758 = scmp.eq.s32.totalorder %s25, 0
          %s759 = ssub.s32 %s343, 1
          %s760 = ssub.s32 %s759, %s753
          %s761 = scalar_select %p758, %s753, %s760
          %s762 = smul.u32 %s761, 8
          %s763 = sshra.s32 %s762, 3
          %s764 = sand.u32 %s762, 7
          %s765 = smul.u32 %s763, 3
          %s766 = smul.addr %s765, 8
          %s767 = scalar_lea.vmem [#allocation2], %s766
          %v768 = vld [vmem:[%s767] sm:$0xff]
          %v769 = vld [vmem:[%s767 + $0x8] sm:$0xff]
          %v770 = vld [vmem:[%s767 + $0x10] sm:$0xff]
          %v771 = vld [vmem:[#allocation3] sm:$0xff]
          %v772 = vld [vmem:[%s295] sm:$0xff]
          %v773 = vld [vmem:[%s295 + $0x8] sm:$0xff]
          %v774 = vld [vmem:[%s295 + $0x10] sm:$0xff]
          %v775 = vld [vmem:[%s295 + $0x18] sm:$0xff]
          %v776 = vld [vmem:[%s295 + $0x20] sm:$0xff]
          %v777 = vld [vmem:[%s295 + $0x28] sm:$0xff]
          %v778 = vld [vmem:[%s295 + $0x30] sm:$0xff]
          %v779 = vld [vmem:[%s295 + $0x38] sm:$0xff]
          %v780 = vld [vmem:[%s295 + $0x40] sm:$0xff]
          %v781 = vld [vmem:[%s295 + $0x48] sm:$0xff]
          %v782 = vld [vmem:[%s295 + $0x50] sm:$0xff]
          %v783 = vld [vmem:[%s295 + $0x58] sm:$0xff]
          %v784 = vld [vmem:[%s295 + $0x60] sm:$0xff]
          %v785 = vld [vmem:[%s295 + $0x68] sm:$0xff]
          %v786 = vld [vmem:[%s295 + $0x70] sm:$0xff]
          %v787 = vld [vmem:[%s295 + $0x78] sm:$0xff]
          %v788 = vld [vmem:[%s295 + $0x80] sm:$0xff]
          %v789 = vld [vmem:[%s295 + $0x88] sm:$0xff]
          %v790 = vld [vmem:[%s295 + $0x90] sm:$0xff]
          %v791 = vld [vmem:[%s295 + $0x98] sm:$0xff]
          %v792 = vld [vmem:[%s295 + $0xa0] sm:$0xff]
          %v793 = vld [vmem:[%s295 + $0xa8] sm:$0xff]
          %v794 = vld [vmem:[%s295 + $0xb0] sm:$0xff]
          %v795 = vld [vmem:[%s295 + $0xb8] sm:$0xff]
          %v796 = vld [vmem:[%s295 + $0xc0] sm:$0xff]
          %v797 = vld [vmem:[%s295 + $0xc8] sm:$0xff]
          %v798 = vld [vmem:[%s295 + $0xd0] sm:$0xff]
          %v799 = vld [vmem:[%s295 + $0xd8] sm:$0xff]
          %v800 = vld [vmem:[%s295 + $0xe0] sm:$0xff]
          %v801 = vld [vmem:[%s295 + $0xe8] sm:$0xff]
          %v802 = vld [vmem:[%s295 + $0xf0] sm:$0xff]
          %v803 = vld [vmem:[%s295 + $0xf8] sm:$0xff]
          %v804 = vld [vmem:[%s295 + $0x100] sm:$0xff]
          %v805 = vld [vmem:[%s295 + $0x108] sm:$0xff]
          %v806 = vld [vmem:[%s295 + $0x110] sm:$0xff]
          %v807 = vld [vmem:[%s295 + $0x118] sm:$0xff]
          %v808 = vld [vmem:[%s295 + $0x120] sm:$0xff]
          %v809 = vld [vmem:[%s295 + $0x128] sm:$0xff]
          %v810 = vld [vmem:[%s295 + $0x130] sm:$0xff]
          %v811 = vld [vmem:[%s295 + $0x138] sm:$0xff]
          %v812 = vld [vmem:[%s295 + $0x140] sm:$0xff]
          %v813 = vld [vmem:[%s295 + $0x148] sm:$0xff]
          %v814 = vld [vmem:[%s295 + $0x150] sm:$0xff]
          %v815 = vld [vmem:[%s295 + $0x158] sm:$0xff]
          %v816 = vld [vmem:[%s295 + $0x160] sm:$0xff]
          %v817 = vld [vmem:[%s295 + $0x168] sm:$0xff]
          %v818 = vld [vmem:[%s295 + $0x170] sm:$0xff]
          %v819 = vld [vmem:[%s295 + $0x178] sm:$0xff]
          %820 = vmatpush.msra.mxu0 %v817
          %821 = vmatpush.msra.mxu0 %v814
          %822 = vmatpush.msra.mxu0 %v811
          %823 = vmatpush.msra.mxu0 %v808
          %824 = vmatpush.msra.mxu0 %v805
          %825 = vmatpush.msra.mxu0 %v802
          %826 = vmatpush.msra.mxu0 %v799
          %827 = vmatpush.msra.mxu0 %v796
          %828 = vmatpush.msra.mxu0 %v793
          %829 = vmatpush.msra.mxu0 %v790
          %830 = vmatpush.msra.mxu0 %v787
          %831 = vmatpush.msra.mxu0 %v784
          %832 = vmatpush.msra.mxu0 %v781
          %833 = vmatpush.msra.mxu0 %v778
          %834 = vmatpush.msra.mxu0 %v775
          %835 = vmatpush.msra.mxu0 %v772
          %836 = vmatmul.f32.gmra.mxu0 %v771
          %v837 = vpop.f32.mrf.mxu0
          %v838 = vadd.f32 0.0, %v837
          %839 = vdwg.mxu0
          %840 = vmatpush.msra.mxu0 %v818
          %841 = vmatpush.msra.mxu0 %v815
          %842 = vmatpush.msra.mxu0 %v812
          %843 = vmatpush.msra.mxu0 %v809
          %844 = vmatpush.msra.mxu0 %v806
          %845 = vmatpush.msra.mxu0 %v803
          %846 = vmatpush.msra.mxu0 %v800
          %847 = vmatpush.msra.mxu0 %v797
          %848 = vmatpush.msra.mxu0 %v794
          %849 = vmatpush.msra.mxu0 %v791
          %850 = vmatpush.msra.mxu0 %v788
          %851 = vmatpush.msra.mxu0 %v785
          %852 = vmatpush.msra.mxu0 %v782
          %853 = vmatpush.msra.mxu0 %v779
          %854 = vmatpush.msra.mxu0 %v776
          %855 = vmatpush.msra.mxu0 %v773
          %856 = vmatmul.f32.gmra.mxu0 %v771
          %v857 = vpop.f32.mrf.mxu0
          %v858 = vadd.f32 0.0, %v857
          %859 = vdwg.mxu0
          %860 = vmatpush.msra.mxu0 %v819
          %861 = vmatpush.msra.mxu0 %v816
          %862 = vmatpush.msra.mxu0 %v813
          %863 = vmatpush.msra.mxu0 %v810
          %864 = vmatpush.msra.mxu0 %v807
          %865 = vmatpush.msra.mxu0 %v804
          %866 = vmatpush.msra.mxu0 %v801
          %867 = vmatpush.msra.mxu0 %v798
          %868 = vmatpush.msra.mxu0 %v795
          %869 = vmatpush.msra.mxu0 %v792
          %870 = vmatpush.msra.mxu0 %v789
          %871 = vmatpush.msra.mxu0 %v786
          %872 = vmatpush.msra.mxu0 %v783
          %873 = vmatpush.msra.mxu0 %v780
          %874 = vmatpush.msra.mxu0 %v777
          %875 = vmatpush.msra.mxu0 %v774
          %876 = vmatmul.f32.gmra.mxu0 %v771
          %v877 = vpop.f32.mrf.mxu0
          %v878 = vadd.f32 0.0, %v877
          %879 = vdwg.mxu0
          %v880 = vadd.f32 %v768, %v838
          %v881 = vxor.u32 %v880, 2147483648
          %v882 = vmul.f32 %v881, 1.442695
          %v883 = vpow.pop %v882
          %v884 = vadd.f32 %v883, 1.0
          %v885 = vrcp.pop %v884
          %v886 = vmul.f32 %v884, %v885
          %v887 = vsub.f32 1.0, %v886
          %v888 = vmul.f32 %v885, %v887
          %v889 = vadd.f32 %v885, %v888
          %vm890 = vweird.f32 %v884
          %vm891 = vweird.f32 %v885
          %vm892 = vmor %vm890, %vm891
          %v893 = vsel %vm892, %v885, %v889
          %v894 = vand.u32 2147483647, %v884
          %vm895 = vcmp.eq.f32.partialorder %v894, 8.507059e+37
          %v896 = vand.u32 %v884, 2147483648
          %v897 = vor.u32 1.1754944e-38, %v896
          %v898 = vsel %vm895, %v897, %v893
          %v899 = vmul.f32 1.0, %v898
          %v900 = vadd.f32 %v769, %v858
          %v901 = vxor.u32 %v900, 2147483648
          %v902 = vmul.f32 %v901, 1.442695
          %v903 = vpow.pop %v902
          %v904 = vadd.f32 %v903, 1.0
          %v905 = vrcp.pop %v904
          %v906 = vmul.f32 %v904, %v905
          %v907 = vsub.f32 1.0, %v906
          %v908 = vmul.f32 %v905, %v907
          %v909 = vadd.f32 %v905, %v908
          %vm910 = vweird.f32 %v904
          %vm911 = vweird.f32 %v905
          %vm912 = vmor %vm910, %vm911
          %v913 = vsel %vm912, %v905, %v909
          %v914 = vand.u32 2147483647, %v904
          %vm915 = vcmp.eq.f32.partialorder %v914, 8.507059e+37
          %v916 = vand.u32 %v904, 2147483648
          %v917 = vor.u32 1.1754944e-38, %v916
          %v918 = vsel %vm915, %v917, %v913
          %v919 = vmul.f32 1.0, %v918
          %v920 = vadd.f32 %v878, %v750
          %v921 = vmul.f32 %v899, %v920
          %v922 = vadd.f32 %v770, %v921
          %v923 = vtanh.pop %v922
          %v924 = vsub.f32 1.0, %v919
          %v925 = vmul.f32 %v924, %v923
          %v926 = vmul.f32 %v919, %v771
          %v927 = vadd.f32 %v925, %v926
          %v928 = vstv %s761
          %vm929 = vcmp.lt.s32.totalorder %v928, %v747
          %v930 = vsel %vm929, 1, 0
          %v931 = vcvt.s32.f32 %v930
          %933 = vset.pattern.permute.xlu0 0
          %934 = vperm.xlu0 %933, %v931
          %v935 = vpop.permute.xlu0 %934
          %v937 = vmul.f32 %v935, %v927
          %v938 = vsub.f32 1.0, %v931
          %940 = vset.pattern.permute.xlu0 0
          %941 = vperm.xlu0 %940, %v938
          %v942 = vpop.permute.xlu0 %941
          %v944 = vmul.f32 %v942, %v771
          %v945 = vadd.f32 %v937, %v944
          %946 = vst [vmem:[#allocation3] sm:$0xff] %v945
          %s947 = scalar_lea.vmem %s335, %s762 [#allocation10]
          %948 = vst [vmem:[%s947] sm:$0xff] %v937
        $region61: #{encoder_text_forward.4} parent=43 // loop_footer
          %s755 = sadd.s32 %s753, 1
        $region62: #{encoder_text_forward.4} parent=43 // loop_footer_branch
          %752 = sbr.rel target = $region58
        $region63: #{encoder_text_forward.4} parent=43 // loop_exit
          _
        %s949 = sand.u32 %s179, 1
        %s950 = sand.u32 %s179, 1
        %s951 = smul.addr %s950, 64
        %s952 = scalar_lea.vmem [#allocation10], %s951
        // Predicated region
        $region64: #{encoder_text_forward.4} parent=43 // pred_check
          %p953 = pneg %p189
        $region65: #{encoder_text_forward.4} parent=43 // pred_check_branch
          %955 = sbr.rel (%p953) target = $region67
        $region66: #{encoder_text_forward.4} parent=43 // pred_region
          %s956 = smul.addr %s25, 8
          %s957 = scalar_lea.vmem %s7, %s956
          // Predicated region
          $region68: #{encoder_text_forward.4} parent=66 // pred_check
            _
          $region69: #{encoder_text_forward.4} parent=66 // pred_check_branch
            %959 = sbr.rel (0) target = $region71
          $region70: #{encoder_text_forward.4} parent=66 // pred_region
            // Predicated region
            $region72: #{encoder_text_forward.4} parent=70 // pred_check
              _
            $region73: #{encoder_text_forward.4} parent=70 // pred_check_branch
              %961 = sbr.rel (0) target = $region75
            $region74: #{encoder_text_forward.4} parent=70 // pred_region
              // Predicated region
              $region87: #{encoder_text_forward.4} parent=74 // pred_check
                _
              $region88: #{encoder_text_forward.4} parent=74 // pred_check_branch
                %991 = sbr.rel (0) target = $region90
              $region89: #{encoder_text_forward.4} parent=74 // pred_region
                loop: start=0, step=1, limit=1
                $region91: #{encoder_text_forward.4} parent=89 // loop_pre_header
                  _
                $region92: #{encoder_text_forward.4} parent=89 // loop_header
                  %s993 = sphi 0, %s997
                  %p994 = scmp.ge.s32.totalorder %s993, 1
                  %s998 = sphi %s952, %s952
                  %s999 = sphi %s957, %s957
                $region93: #{encoder_text_forward.4} parent=89 // loop_header_branch
                  %996 = sbr.rel (%p994) target = $region97
                $region94: #{encoder_text_forward.4} parent=89 // loop_body
                  %v1000 = vld [vmem:[%s998] sm:$0xff]
                  %1001 = vst [vmem:[%s999] sm:$0xff] %v1000
                  %v1002 = vld [vmem:[%s998 + $0x8] sm:$0xff]
                  %1003 = vst [vmem:[%s999 + $0x10] sm:$0xff] %v1002
                  %v1004 = vld [vmem:[%s998 + $0x10] sm:$0xff]
                  %1005 = vst [vmem:[%s999 + $0x20] sm:$0xff] %v1004
                  %v1006 = vld [vmem:[%s998 + $0x18] sm:$0xff]
                  %1007 = vst [vmem:[%s999 + $0x30] sm:$0xff] %v1006
                  %v1008 = vld [vmem:[%s998 + $0x20] sm:$0xff]
                  %1009 = vst [vmem:[%s999 + $0x40] sm:$0xff] %v1008
                  %v1010 = vld [vmem:[%s998 + $0x28] sm:$0xff]
                  %1011 = vst [vmem:[%s999 + $0x50] sm:$0xff] %v1010
                  %v1012 = vld [vmem:[%s998 + $0x30] sm:$0xff]
                  %1013 = vst [vmem:[%s999 + $0x60] sm:$0xff] %v1012
                  %v1014 = vld [vmem:[%s998 + $0x38] sm:$0xff]
                  %1015 = vst [vmem:[%s999 + $0x70] sm:$0xff] %v1014
                $region95: #{encoder_text_forward.4} parent=89 // loop_footer
                  %s997 = sadd.s32 1, %s993
                $region96: #{encoder_text_forward.4} parent=89 // loop_footer_branch
                  %992 = sbr.rel target = $region92
                $region97: #{encoder_text_forward.4} parent=89 // loop_exit
                  _
              $region90: #{encoder_text_forward.4} parent=74 // pred_fallthru
                _
              // Predicated region
              $region98: #{encoder_text_forward.4} parent=74 // pred_check
                _
              $region99: #{encoder_text_forward.4} parent=74 // pred_check_branch
                %1017 = sbr.rel target = $region101
              $region100: #{encoder_text_forward.4} parent=74 // pred_region
                _
              $region101: #{encoder_text_forward.4} parent=74 // pred_fallthru
                _
            $region75: #{encoder_text_forward.4} parent=70 // pred_fallthru
              _
            // Predicated region
            $region76: #{encoder_text_forward.4} parent=70 // pred_check
              _
            $region77: #{encoder_text_forward.4} parent=70 // pred_check_branch
              %963 = sbr.rel target = $region79
            $region78: #{encoder_text_forward.4} parent=70 // pred_region
              %s965 = ssub.s32 256, 1
              loop: start=0, step=1, limit=1
              $region80: #{encoder_text_forward.4} parent=78 // loop_pre_header
                _
              $region81: #{encoder_text_forward.4} parent=78 // loop_header
                %s967 = sphi 0, %s971
                %p968 = scmp.ge.s32.totalorder %s967, 1
                %s972 = sphi %s952, %s952
                %s973 = sphi %s957, %s957
              $region82: #{encoder_text_forward.4} parent=78 // loop_header_branch
                %970 = sbr.rel (%p968) target = $region86
              $region83: #{encoder_text_forward.4} parent=78 // loop_body
                %v974 = vld [vmem:[%s972] sm:%s965]
                %975 = vst [vmem:[%s973] sm:%s965] %v974
                %v976 = vld [vmem:[%s972 + $0x8] sm:%s965]
                %977 = vst [vmem:[%s973 + $0x10] sm:%s965] %v976
                %v978 = vld [vmem:[%s972 + $0x10] sm:%s965]
                %979 = vst [vmem:[%s973 + $0x20] sm:%s965] %v978
                %v980 = vld [vmem:[%s972 + $0x18] sm:%s965]
                %981 = vst [vmem:[%s973 + $0x30] sm:%s965] %v980
                %v982 = vld [vmem:[%s972 + $0x20] sm:%s965]
                %983 = vst [vmem:[%s973 + $0x40] sm:%s965] %v982
                %v984 = vld [vmem:[%s972 + $0x28] sm:%s965]
                %985 = vst [vmem:[%s973 + $0x50] sm:%s965] %v984
                %v986 = vld [vmem:[%s972 + $0x30] sm:%s965]
                %987 = vst [vmem:[%s973 + $0x60] sm:%s965] %v986
                %v988 = vld [vmem:[%s972 + $0x38] sm:%s965]
                %989 = vst [vmem:[%s973 + $0x70] sm:%s965] %v988
              $region84: #{encoder_text_forward.4} parent=78 // loop_footer
                %s971 = sadd.s32 1, %s967
              $region85: #{encoder_text_forward.4} parent=78 // loop_footer_branch
                %966 = sbr.rel target = $region81
              $region86: #{encoder_text_forward.4} parent=78 // loop_exit
                _
            $region79: #{encoder_text_forward.4} parent=70 // pred_fallthru
              _
          $region71: #{encoder_text_forward.4} parent=66 // pred_fallthru
            _
          %1018 = vnop
        $region67: #{encoder_text_forward.4} parent=43 // pred_fallthru
          _
      $region44: #{encoder_text_forward.4} parent=5 // pred_fallthru
        _
      %p1019 = scmp.le.s32.totalorder 2, %s20
      // Predicated region
      $region102: #{encoder_text_forward.4} parent=5 // pred_check
        %p1020 = pneg %p1019
      $region103: #{encoder_text_forward.4} parent=5 // pred_check_branch
        %1022 = sbr.rel (%p1020) target = $region105
      $region104: #{encoder_text_forward.4} parent=5 // pred_region
        %s1023 = ssub.s32 %s20, 2
        // Predicated region
        $region106: #{encoder_text_forward.4} parent=104 // pred_check
          %p1024 = pneg %p195
        $region107: #{encoder_text_forward.4} parent=104 // pred_check_branch
          %1026 = sbr.rel (%p1024) target = $region109
        $region108: #{encoder_text_forward.4} parent=104 // pred_region
          %s1027 = sand.u32 %s180, 1
          %s1028 = sand.u32 %s180, 1
          %s1029 = smul.addr %s1028, 64
          %s1030 = scalar_lea.vmem [#allocation10], %s1029
        $region109: #{encoder_text_forward.4} parent=104 // pred_fallthru
          _
      $region105: #{encoder_text_forward.4} parent=5 // pred_fallthru
        _
    $region6: #{encoder_text_forward.4} parent=1 // loop_footer
      %s24 = sadd.s32 1, %s20
    $region7: #{encoder_text_forward.4} parent=1 // loop_footer_branch
      %19 = sbr.rel target = $region3
    $region8: #{encoder_text_forward.4} parent=1 // loop_exit
      _
    %1031 = vsyncpa [#allocation7], 1
    %s1032 = scalar_lea.sflag [#allocation7], 1
    %1033 = vsyncpa %s1032, 1
    %1034 = vsyncpa [#allocation9], 1
    %s1035 = scalar_lea.sflag [#allocation9], 1
    %1036 = vsyncpa %s1035, 1

</llo_original>
